<compile_context>
chip_gen: v7x
topology: tpu7x:2x2x1
jax: 0.10.0
libtpu: 0.0.40
codegen_flags: <defaults>
</compile_context>

<pallas_src>
import functools
import math

import jax
import jax.numpy as jnp
from jax import lax
from jax.experimental import pallas as pl
from jax.experimental.pallas import tpu as pltpu


def _flash_mhsa_kernel(q_ref, k_ref, v_ref, wo_ref, bo_ref, out_ref,
                       m_sc, l_sc, acc_sc, o_sc, *, h, d_v):
    """One (batch, q-tile, kv-tile) grid step of fused multi-head self-attention.

    q_ref : (1, h, block_q,  d_k) bf16 (1/sqrt(d_k) pre-folded)
    k_ref : (1, h, block_kv, d_k) bf16
    v_ref : (1, h, block_kv, d_v) bf16
    wo_ref: (h*d_v, d_model)      bf16 (grid-invariant)
    bo_ref: (1, d_model)          f32  (grid-invariant)
    out_ref: (1, block_q, d_model) bf16 (written only on the last kv step)
    Scratch (persists across the kv axis):
      m_sc, l_sc : (h, block_q, 1)   f32 running max / running sum
      acc_sc     : (h, block_q, d_v) f32 un-normalized output accumulator
      o_sc       : (block_q, h*d_v)  bf16 head-interleaved attention output
    """
    kv = pl.program_id(2)

    @pl.when(kv == 0)
    def _():
        m_sc[...] = jnp.full_like(m_sc, -jnp.inf)
        l_sc[...] = jnp.zeros_like(l_sc)
        acc_sc[...] = jnp.zeros_like(acc_sc)

    q = q_ref[0]   # (h, block_q,  d_k)
    k = k_ref[0]   # (h, block_kv, d_k)
    v = v_ref[0]   # (h, block_kv, d_v)

    # Per-head scores: contract d_k, batch over the leading head axis (no lane slicing,
    # no in-kernel transpose).
    s = lax.dot_general(q, k, (((2,), (2,)), ((0,), (0,))),
                        preferred_element_type=jnp.float32)        # (h, bq, bkv) f32

    # Online (flash) softmax update, f32 math.
    m_prev = m_sc[...]
    m_new = jnp.maximum(m_prev, jnp.max(s, axis=-1, keepdims=True))
    alpha = jnp.exp(m_prev - m_new)
    p = jnp.exp(s - m_new)
    l_sc[...] = alpha * l_sc[...] + jnp.sum(p, axis=-1, keepdims=True)
    pv = lax.dot_general(p.astype(jnp.bfloat16), v, (((2,), (1,)), ((0,), (0,))),
                         preferred_element_type=jnp.float32)       # (h, bq, d_v)
    acc_sc[...] = alpha * acc_sc[...] + pv
    m_sc[...] = m_new
    # TODO(synk): attention_mask / attention_weights / dropout not implemented (eval mode).

    @pl.when(kv == pl.num_programs(2) - 1)
    def _():
        # Normalize head-by-head and interleave into the (block_q, h*d_v) scratch
        # (bounds live ranges; keeps the output matmul's contraction at h*d_v).
        for i in range(h):
            inv_l = pl.reciprocal(l_sc[i], approx=True)            # (block_q, 1)
            o_sc[:, i * d_v:(i + 1) * d_v] = (acc_sc[i] * inv_l).astype(jnp.bfloat16)
        out = jnp.dot(o_sc[...], wo_ref[...],
                      preferred_element_type=jnp.float32) + bo_ref[...]
        out_ref[0] = out.astype(out_ref.dtype)


def _pick_tile(n, cap):
    """Largest power-of-two tile (>=8) that divides n, capped at `cap`; else full n."""
    for cand in (512, 256, 128, 64, 32, 16, 8):
        if cand <= cap and n % cand == 0:
            return cand
    return n


def _vmem_estimate(block_q, block_kv, d_model, d_k, d_v, h):
    bf16, f32 = 2, 4
    return (2 * h * block_q * d_k * bf16                       # Q tile  (double-buffered)
            + 2 * h * block_kv * d_k * bf16                    # K tile
            + 2 * h * block_kv * d_v * bf16                    # V tile
            + 2 * block_q * d_model * bf16                     # output tile
            + 2 * (h * d_v * d_model * bf16 + d_model * f32)   # Wo / bo (worst case 2 bufs)
            + h * block_q * (2 + d_v) * f32                    # m, l, acc scratch
            + block_q * h * d_v * bf16                         # o scratch
            + h * block_q * block_kv * f32)                    # live f32 score tile


def scaled_dot_product_attention(y, params, *, d_model, d_k, d_v, h):
    b_s, nq, dm = y.shape
    assert dm == d_model
    scale = 1.0 / math.sqrt(d_k)

    # ---- Wrapper-side, done ONCE by XLA (not per q-tile): Q/K/V projections, head-major
    #      layout, bf16 cast, scale folded into the Q projection.
    y16 = y.astype(jnp.bfloat16)

    def project(W, b, dh, s=1.0):
        Wt = (W * s).T.astype(jnp.bfloat16)                    # (d_model, h*dh)
        p = jnp.dot(y16, Wt, preferred_element_type=jnp.float32) + (b * s)
        return (p.reshape(b_s, nq, h, dh)
                 .transpose(0, 2, 1, 3)                        # (b_s, h, nq, dh)
                 .astype(jnp.bfloat16))

    q = project(params["Wq"], params["bq"], d_k, scale)
    k = project(params["Wk"], params["bk"], d_k)
    v = project(params["Wv"], params["bv"], d_v)
    WoT = params["Wo"].T.astype(jnp.bfloat16)                  # (h*d_v, d_model)
    bo = params["bo"].reshape(1, d_model).astype(jnp.float32)

    # ---- Tile sizes: capped for v7x's 64 MiB VMEM, shrink until the buffer sum fits.
    block_q = _pick_tile(nq, 256)
    block_kv = _pick_tile(nq, 512)
    budget = 40 * 2**20
    while _vmem_estimate(block_q, block_kv, d_model, d_k, d_v, h) > budget:
        if (block_kv >= block_q and block_kv % 2 == 0 and block_kv > 8
                and nq % (block_kv // 2) == 0):
            block_kv //= 2
        elif block_q % 2 == 0 and block_q > 8 and nq % (block_q // 2) == 0:
            block_q //= 2
        else:
            break
    n_q, n_kv = nq // block_q, nq // block_kv

    est = _vmem_estimate(block_q, block_kv, d_model, d_k, d_v, h)
    vmem_limit = int(min(max(est * 1.25, 32 * 2**20), 56 * 2**20))

    kernel = functools.partial(_flash_mhsa_kernel, h=h, d_v=d_v)
    const = lambda b, qi, ki: (0, 0)   # grid-invariant → stays VMEM-resident

    def build(buffered_weights):
        if buffered_weights:
            w_spec = lambda shape: pl.BlockSpec(shape, const, pipeline_mode=pl.Buffered(1))
        else:
            w_spec = lambda shape: pl.BlockSpec(shape, const)
        return pl.pallas_call(
            kernel,
            out_shape=jax.ShapeDtypeStruct((b_s, nq, d_model), jnp.bfloat16),
            grid_spec=pltpu.PrefetchScalarGridSpec(
                num_scalar_prefetch=0,
                grid=(b_s, n_q, n_kv),
                in_specs=[
                    pl.BlockSpec((1, h, block_q, d_k), lambda b, qi, ki: (b, 0, qi, 0)),
                    pl.BlockSpec((1, h, block_kv, d_k), lambda b, qi, ki: (b, 0, ki, 0)),
                    pl.BlockSpec((1, h, block_kv, d_v), lambda b, qi, ki: (b, 0, ki, 0)),
                    w_spec((h * d_v, d_model)),                 # WoT
                    w_spec((1, d_model)),                       # bo
                ],
                out_specs=pl.BlockSpec((1, block_q, d_model),
                                       lambda b, qi, ki: (b, qi, 0)),
                scratch_shapes=[
                    pltpu.VMEM((h, block_q, 1), jnp.float32),      # running max
                    pltpu.VMEM((h, block_q, 1), jnp.float32),      # running sum
                    pltpu.VMEM((h, block_q, d_v), jnp.float32),    # accumulator
                    pltpu.VMEM((block_q, h * d_v), jnp.bfloat16),  # head-interleaved o
                ]),
            compiler_params=pltpu.CompilerParams(
                dimension_semantics=("parallel", "parallel", "arbitrary"),
                vmem_limit_bytes=vmem_limit),
        )

    try:
        return build(True)(q, k, v, WoT, bo)
    except Exception:
        # pl.Buffered(1) not supported by this jax/libtpu combo → default double buffering.
        return build(False)(q, k, v, WoT, bo)


def init_params(key, d_model, d_k, d_v, h):
    """Matches the module's init_weights: Linear weights ~ N(0, 0.001), biases = 0."""
    k0, k1, k2, k3 = jax.random.split(key, 4)
    std = 0.001
    return {
        "Wq": std * jax.random.normal(k0, (h * d_k, d_model), jnp.float32),
        "bq": jnp.zeros((h * d_k,), jnp.float32),
        "Wk": std * jax.random.normal(k1, (h * d_k, d_model), jnp.float32),
        "bk": jnp.zeros((h * d_k,), jnp.float32),
        "Wv": std * jax.random.normal(k2, (h * d_v, d_model), jnp.float32),
        "bv": jnp.zeros((h * d_v,), jnp.float32),
        "Wo": std * jax.random.normal(k3, (d_model, h * d_v), jnp.float32),
        "bo": jnp.zeros((d_model,), jnp.float32),
    }


def reference_attention(y, params, *, d_model, d_k, d_v, h):
    """Plain-JAX reference mirroring the PyTorch forward (eval mode)."""
    b_s, nq, _ = y.shape
    q = (y @ params["Wq"].T + params["bq"]).reshape(b_s, nq, h, d_k).transpose(0, 2, 1, 3)
    k = (y @ params["Wk"].T + params["bk"]).reshape(b_s, nq, h, d_k).transpose(0, 2, 3, 1)
    v = (y @ params["Wv"].T + params["bv"]).reshape(b_s, nq, h, d_v).transpose(0, 2, 1, 3)
    att = jnp.matmul(q, k) / math.sqrt(d_k)
    att = jax.nn.softmax(att, axis=-1)
    out = jnp.matmul(att, v).transpose(0, 2, 1, 3).reshape(b_s, nq, h * d_v)
    return out @ params["Wo"].T + params["bo"]


if __name__ == "__main__":
    d_model, d_k, d_v, h = 32, 8, 8, 4
    b_s, nq = 2, 8

    key = jax.random.PRNGKey(0)
    k_y, k_p = jax.random.split(key)
    y = jax.random.normal(k_y, (b_s, nq, d_model), jnp.float32)
    params = init_params(k_p, d_model, d_k, d_v, h)

    out = scaled_dot_product_attention(y, params, d_model=d_model, d_k=d_k, d_v=d_v, h=h)
    out = jax.block_until_ready(out)
    assert out.shape == (b_s, nq, d_model)
    out_f32 = out.astype(jnp.float32)
    assert bool(jnp.all(jnp.isfinite(out_f32)))

    # Compare against an f32 reference evaluated with the same bf16-cast inputs
    # (the kernel path uses bf16 activations/weights, f32 accumulation, bf16 output).
    y_q = y.astype(jnp.bfloat16).astype(jnp.float32)
    params_q = {name: (val.astype(jnp.bfloat16).astype(jnp.float32)
                       if name.startswith("W") else val)
                for name, val in params.items()}
    ref = reference_attention(y_q, params_q, d_model=d_model, d_k=d_k, d_v=d_v, h=h)
    max_err = float(jnp.max(jnp.abs(out_f32 - ref)))
    assert jnp.allclose(out_f32, ref, atol=2e-6, rtol=5e-2), f"mismatch vs reference: {max_err}"

    print("KERNEL_OK")
</pallas_src>

<mosaic_0001>
module attributes {stable_mosaic.version = 11 : i64} {
  func.func @_flash_mhsa_kernel(%arg0: i32, %arg1: i32, %arg2: i32, %arg3: memref<1x4x8x8xbf16, #tpu.memory_space<vmem>>, %arg4: memref<1x4x8x8xbf16, #tpu.memory_space<vmem>>, %arg5: memref<1x4x8x8xbf16, #tpu.memory_space<vmem>>, %arg6: memref<32x32xbf16, #tpu.memory_space<vmem>>, %arg7: memref<1x32xf32, #tpu.memory_space<vmem>>, %arg8: memref<1x8x32xbf16, #tpu.memory_space<vmem>>, %arg9: memref<4x8x1xf32, #tpu.memory_space<vmem>>, %arg10: memref<4x8x1xf32, #tpu.memory_space<vmem>>, %arg11: memref<4x8x8xf32, #tpu.memory_space<vmem>>, %arg12: memref<8x32xbf16, #tpu.memory_space<vmem>>) attributes {dimension_semantics = [#tpu.dimension_semantics<parallel>, #tpu.dimension_semantics<parallel>, #tpu.dimension_semantics<arbitrary>], iteration_bounds = array<i64: 2, 1, 1>, scalar_prefetch = 0 : i64, scratch_operands = 4 : i64, tpu.core_type = #tpu.core_type<tc>, window_params = [{transform_indices = @transform_0, window_bounds = array<i64: 1, 4, 8, 8>}, {transform_indices = @transform_1, window_bounds = array<i64: 1, 4, 8, 8>}, {transform_indices = @transform_2, window_bounds = array<i64: 1, 4, 8, 8>}, {pipeline_mode = #tpu.pipeline_mode<synchronous>, transform_indices = @transform_3, window_bounds = array<i64: 32, 32>}, {pipeline_mode = #tpu.pipeline_mode<synchronous>, transform_indices = @transform_4, window_bounds = array<i64: 1, 32>}, {transform_indices = @transform_5, window_bounds = array<i64: 1, 8, 32>}]} {
    %c0_i32 = arith.constant 0 : i32
    %0 = arith.cmpi eq, %arg2, %c0_i32 : i32
    %1 = arith.extui %0 : i1 to i32
    %c0_i32_0 = arith.constant 0 : i32
    %2 = arith.cmpi ne, %1, %c0_i32_0 : i32
    scf.if %2 {
      %cst_35 = arith.constant 0xFF800000 : f32
      %36 = vector.broadcast %cst_35 : f32 to vector<4x8x1xf32>
      %c0_36 = arith.constant 0 : index
      %c0_37 = arith.constant 0 : index
      %c0_38 = arith.constant 0 : index
      %37 = vector.load %arg9[%c0_36, %c0_37, %c0_38] : memref<4x8x1xf32, #tpu.memory_space<vmem>>, vector<4x8x1xf32>
      tpu.vector_store %arg9[%c0_36, %c0_37, %c0_38], %36 {strides = array<i32>} : memref<4x8x1xf32, #tpu.memory_space<vmem>>, vector<4x8x1xf32>,
      %cst_39 = arith.constant 0.000000e+00 : f32
      %38 = vector.broadcast %cst_39 : f32 to vector<4x8x1xf32>
      %c0_40 = arith.constant 0 : index
      %c0_41 = arith.constant 0 : index
      %c0_42 = arith.constant 0 : index
      %39 = vector.load %arg10[%c0_40, %c0_41, %c0_42] : memref<4x8x1xf32, #tpu.memory_space<vmem>>, vector<4x8x1xf32>
      tpu.vector_store %arg10[%c0_40, %c0_41, %c0_42], %38 {strides = array<i32>} : memref<4x8x1xf32, #tpu.memory_space<vmem>>, vector<4x8x1xf32>,
      %cst_43 = arith.constant 0.000000e+00 : f32
      %40 = vector.broadcast %cst_43 : f32 to vector<4x8x8xf32>
      %c0_44 = arith.constant 0 : index
      %c0_45 = arith.constant 0 : index
      %c0_46 = arith.constant 0 : index
      %41 = vector.load %arg11[%c0_44, %c0_45, %c0_46] : memref<4x8x8xf32, #tpu.memory_space<vmem>>, vector<4x8x8xf32>
      tpu.vector_store %arg11[%c0_44, %c0_45, %c0_46], %40 {strides = array<i32>} : memref<4x8x8xf32, #tpu.memory_space<vmem>>, vector<4x8x8xf32>,
    } else {
    }
    %c0 = arith.constant 0 : index
    %c0_1 = arith.constant 0 : index
    %c0_2 = arith.constant 0 : index
    %c0_3 = arith.constant 0 : index
    %3 = vector.load %arg3[%c0, %c0_1, %c0_2, %c0_3] : memref<1x4x8x8xbf16, #tpu.memory_space<vmem>>, vector<1x4x8x8xbf16>
    %4 = vector.shape_cast %3 : vector<1x4x8x8xbf16> to vector<4x8x8xbf16>
    %c0_4 = arith.constant 0 : index
    %c0_5 = arith.constant 0 : index
    %c0_6 = arith.constant 0 : index
    %c0_7 = arith.constant 0 : index
    %5 = vector.load %arg4[%c0_4, %c0_5, %c0_6, %c0_7] : memref<1x4x8x8xbf16, #tpu.memory_space<vmem>>, vector<1x4x8x8xbf16>
    %6 = vector.shape_cast %5 : vector<1x4x8x8xbf16> to vector<4x8x8xbf16>
    %c0_8 = arith.constant 0 : index
    %c0_9 = arith.constant 0 : index
    %c0_10 = arith.constant 0 : index
    %c0_11 = arith.constant 0 : index
    %7 = vector.load %arg5[%c0_8, %c0_9, %c0_10, %c0_11] : memref<1x4x8x8xbf16, #tpu.memory_space<vmem>>, vector<1x4x8x8xbf16>
    %8 = vector.shape_cast %7 : vector<1x4x8x8xbf16> to vector<4x8x8xbf16>
    %cst = arith.constant dense<0.000000e+00> : vector<4x8x8xf32>
    %9 = tpu.matmul %4, %6, %cst {dimension_numbers = #tpu.dot_dimension_numbers<[2], [2], [1], [1], [0, 0, 0, 1, 1, 1], [0], [0]>} : vector<4x8x8xbf16>, vector<4x8x8xbf16>, vector<4x8x8xf32> -> vector<4x8x8xf32>
    %c0_12 = arith.constant 0 : index
    %c0_13 = arith.constant 0 : index
    %c0_14 = arith.constant 0 : index
    %10 = vector.load %arg9[%c0_12, %c0_13, %c0_14] : memref<4x8x1xf32, #tpu.memory_space<vmem>>, vector<4x8x1xf32>
    %cst_15 = arith.constant dense<0xFF800000> : vector<4x8xf32>
    %11 = vector.multi_reduction <maximumf>, %9, %cst_15 [2] : vector<4x8x8xf32> to vector<4x8xf32>
    %12 = vector.shape_cast %11 : vector<4x8xf32> to vector<4x8x1xf32>
    %13 = arith.maximumf %10, %12 : vector<4x8x1xf32>
    %14 = arith.subf %10, %13 : vector<4x8x1xf32>
    %15 = math.exp %14 : vector<4x8x1xf32>
    %16 = vector.broadcast %13 : vector<4x8x1xf32> to vector<4x8x8xf32>
    %17 = arith.subf %9, %16 : vector<4x8x8xf32>
    %18 = math.exp %17 : vector<4x8x8xf32>
    %c0_16 = arith.constant 0 : index
    %c0_17 = arith.constant 0 : index
    %c0_18 = arith.constant 0 : index
    %19 = vector.load %arg10[%c0_16, %c0_17, %c0_18] : memref<4x8x1xf32, #tpu.memory_space<vmem>>, vector<4x8x1xf32>
    %20 = arith.mulf %15, %19 : vector<4x8x1xf32>
    %cst_19 = arith.constant dense<0.000000e+00> : vector<4x8xf32>
    %21 = vector.multi_reduction <add>, %18, %cst_19 [2] : vector<4x8x8xf32> to vector<4x8xf32>
    %22 = vector.shape_cast %21 : vector<4x8xf32> to vector<4x8x1xf32>
    %23 = arith.addf %20, %22 : vector<4x8x1xf32>
    %c0_20 = arith.constant 0 : index
    %c0_21 = arith.constant 0 : index
    %c0_22 = arith.constant 0 : index
    %24 = vector.load %arg10[%c0_20, %c0_21, %c0_22] : memref<4x8x1xf32, #tpu.memory_space<vmem>>, vector<4x8x1xf32>
    tpu.vector_store %arg10[%c0_20, %c0_21, %c0_22], %23 {strides = array<i32>} : memref<4x8x1xf32, #tpu.memory_space<vmem>>, vector<4x8x1xf32>,
    %25 = arith.truncf %18 : vector<4x8x8xf32> to vector<4x8x8xbf16>
    %cst_23 = arith.constant dense<0.000000e+00> : vector<4x8x8xf32>
    %26 = tpu.matmul %25, %8, %cst_23 {dimension_numbers = #tpu.dot_dimension_numbers<[2], [1], [1], [2], [0, 0, 0, 1, 1, 2], [0], [0]>} : vector<4x8x8xbf16>, vector<4x8x8xbf16>, vector<4x8x8xf32> -> vector<4x8x8xf32>
    %c0_24 = arith.constant 0 : index
    %c0_25 = arith.constant 0 : index
    %c0_26 = arith.constant 0 : index
    %27 = vector.load %arg11[%c0_24, %c0_25, %c0_26] : memref<4x8x8xf32, #tpu.memory_space<vmem>>, vector<4x8x8xf32>
    %28 = vector.broadcast %15 : vector<4x8x1xf32> to vector<4x8x8xf32>
    %29 = arith.mulf %28, %27 : vector<4x8x8xf32>
    %30 = arith.addf %29, %26 : vector<4x8x8xf32>
    %c0_27 = arith.constant 0 : index
    %c0_28 = arith.constant 0 : index
    %c0_29 = arith.constant 0 : index
    %31 = vector.load %arg11[%c0_27, %c0_28, %c0_29] : memref<4x8x8xf32, #tpu.memory_space<vmem>>, vector<4x8x8xf32>
    tpu.vector_store %arg11[%c0_27, %c0_28, %c0_29], %30 {strides = array<i32>} : memref<4x8x8xf32, #tpu.memory_space<vmem>>, vector<4x8x8xf32>,
    %c0_30 = arith.constant 0 : index
    %c0_31 = arith.constant 0 : index
    %c0_32 = arith.constant 0 : index
    %32 = vector.load %arg9[%c0_30, %c0_31, %c0_32] : memref<4x8x1xf32, #tpu.memory_space<vmem>>, vector<4x8x1xf32>
    tpu.vector_store %arg9[%c0_30, %c0_31, %c0_32], %13 {strides = array<i32>} : memref<4x8x1xf32, #tpu.memory_space<vmem>>, vector<4x8x1xf32>,
    %c0_i32_33 = arith.constant 0 : i32
    %33 = arith.cmpi eq, %arg2, %c0_i32_33 : i32
    %34 = arith.extui %33 : i1 to i32
    %c0_i32_34 = arith.constant 0 : i32
    %35 = arith.cmpi ne, %34, %c0_i32_34 : i32
    scf.if %35 {
      %c0_35 = arith.constant 0 : index
      %c0_36 = arith.constant 0 : index
      %c0_37 = arith.constant 0 : index
      %36 = vector.load %arg10[%c0_35, %c0_36, %c0_37] : memref<4x8x1xf32, #tpu.memory_space<vmem>>, vector<1x8x1xf32>
      %37 = vector.shape_cast %36 : vector<1x8x1xf32> to vector<8x1xf32>
      %38 = tpu.reciprocal %37 {approx = true} : vector<8x1xf32> -> vector<8x1xf32>
      %c0_38 = arith.constant 0 : index
      %c0_39 = arith.constant 0 : index
      %c0_40 = arith.constant 0 : index
      %39 = vector.load %arg11[%c0_38, %c0_39, %c0_40] : memref<4x8x8xf32, #tpu.memory_space<vmem>>, vector<1x8x8xf32>
      %40 = vector.shape_cast %39 : vector<1x8x8xf32> to vector<8x8xf32>
      %41 = vector.broadcast %38 : vector<8x1xf32> to vector<8x8xf32>
      %42 = arith.mulf %40, %41 : vector<8x8xf32>
      %43 = arith.truncf %42 : vector<8x8xf32> to vector<8x8xbf16>
      %c0_41 = arith.constant 0 : index
      %c0_42 = arith.constant 0 : index
      %44 = vector.load %arg12[%c0_41, %c0_42] : memref<8x32xbf16, #tpu.memory_space<vmem>>, vector<8x8xbf16>
      tpu.vector_store %arg12[%c0_41, %c0_42], %43 {strides = array<i32>} : memref<8x32xbf16, #tpu.memory_space<vmem>>, vector<8x8xbf16>,
      %c1 = arith.constant 1 : index
      %c0_43 = arith.constant 0 : index
      %c0_44 = arith.constant 0 : index
      %45 = vector.load %arg10[%c1, %c0_43, %c0_44] : memref<4x8x1xf32, #tpu.memory_space<vmem>>, vector<1x8x1xf32>
      %46 = vector.shape_cast %45 : vector<1x8x1xf32> to vector<8x1xf32>
      %47 = tpu.reciprocal %46 {approx = true} : vector<8x1xf32> -> vector<8x1xf32>
      %c1_45 = arith.constant 1 : index
      %c0_46 = arith.constant 0 : index
      %c0_47 = arith.constant 0 : index
      %48 = vector.load %arg11[%c1_45, %c0_46, %c0_47] : memref<4x8x8xf32, #tpu.memory_space<vmem>>, vector<1x8x8xf32>
      %49 = vector.shape_cast %48 : vector<1x8x8xf32> to vector<8x8xf32>
      %50 = vector.broadcast %47 : vector<8x1xf32> to vector<8x8xf32>
      %51 = arith.mulf %49, %50 : vector<8x8xf32>
      %52 = arith.truncf %51 : vector<8x8xf32> to vector<8x8xbf16>
      %c0_48 = arith.constant 0 : index
      %c8 = arith.constant 8 : index
      %53 = vector.load %arg12[%c0_48, %c8] : memref<8x32xbf16, #tpu.memory_space<vmem>>, vector<8x8xbf16>
      tpu.vector_store %arg12[%c0_48, %c8], %52 {strides = array<i32>} : memref<8x32xbf16, #tpu.memory_space<vmem>>, vector<8x8xbf16>,
      %c2 = arith.constant 2 : index
      %c0_49 = arith.constant 0 : index
      %c0_50 = arith.constant 0 : index
      %54 = vector.load %arg10[%c2, %c0_49, %c0_50] : memref<4x8x1xf32, #tpu.memory_space<vmem>>, vector<1x8x1xf32>
      %55 = vector.shape_cast %54 : vector<1x8x1xf32> to vector<8x1xf32>
      %56 = tpu.reciprocal %55 {approx = true} : vector<8x1xf32> -> vector<8x1xf32>
      %c2_51 = arith.constant 2 : index
      %c0_52 = arith.constant 0 : index
      %c0_53 = arith.constant 0 : index
      %57 = vector.load %arg11[%c2_51, %c0_52, %c0_53] : memref<4x8x8xf32, #tpu.memory_space<vmem>>, vector<1x8x8xf32>
      %58 = vector.shape_cast %57 : vector<1x8x8xf32> to vector<8x8xf32>
      %59 = vector.broadcast %56 : vector<8x1xf32> to vector<8x8xf32>
      %60 = arith.mulf %58, %59 : vector<8x8xf32>
      %61 = arith.truncf %60 : vector<8x8xf32> to vector<8x8xbf16>
      %c0_54 = arith.constant 0 : index
      %c16 = arith.constant 16 : index
      %62 = vector.load %arg12[%c0_54, %c16] : memref<8x32xbf16, #tpu.memory_space<vmem>>, vector<8x8xbf16>
      tpu.vector_store %arg12[%c0_54, %c16], %61 {strides = array<i32>} : memref<8x32xbf16, #tpu.memory_space<vmem>>, vector<8x8xbf16>,
      %c3 = arith.constant 3 : index
      %c0_55 = arith.constant 0 : index
      %c0_56 = arith.constant 0 : index
      %63 = vector.load %arg10[%c3, %c0_55, %c0_56] : memref<4x8x1xf32, #tpu.memory_space<vmem>>, vector<1x8x1xf32>
      %64 = vector.shape_cast %63 : vector<1x8x1xf32> to vector<8x1xf32>
      %65 = tpu.reciprocal %64 {approx = true} : vector<8x1xf32> -> vector<8x1xf32>
      %c3_57 = arith.constant 3 : index
      %c0_58 = arith.constant 0 : index
      %c0_59 = arith.constant 0 : index
      %66 = vector.load %arg11[%c3_57, %c0_58, %c0_59] : memref<4x8x8xf32, #tpu.memory_space<vmem>>, vector<1x8x8xf32>
      %67 = vector.shape_cast %66 : vector<1x8x8xf32> to vector<8x8xf32>
      %68 = vector.broadcast %65 : vector<8x1xf32> to vector<8x8xf32>
      %69 = arith.mulf %67, %68 : vector<8x8xf32>
      %70 = arith.truncf %69 : vector<8x8xf32> to vector<8x8xbf16>
      %c0_60 = arith.constant 0 : index
      %c24 = arith.constant 24 : index
      %71 = vector.load %arg12[%c0_60, %c24] : memref<8x32xbf16, #tpu.memory_space<vmem>>, vector<8x8xbf16>
      tpu.vector_store %arg12[%c0_60, %c24], %70 {strides = array<i32>} : memref<8x32xbf16, #tpu.memory_space<vmem>>, vector<8x8xbf16>,
      %c0_61 = arith.constant 0 : index
      %c0_62 = arith.constant 0 : index
      %72 = vector.load %arg12[%c0_61, %c0_62] : memref<8x32xbf16, #tpu.memory_space<vmem>>, vector<8x32xbf16>
      %c0_63 = arith.constant 0 : index
      %c0_64 = arith.constant 0 : index
      %73 = vector.load %arg6[%c0_63, %c0_64] : memref<32x32xbf16, #tpu.memory_space<vmem>>, vector<32x32xbf16>
      %cst_65 = arith.constant dense<0.000000e+00> : vector<8x32xf32>
      %74 = tpu.matmul %72, %73, %cst_65 {dimension_numbers = #tpu.dot_dimension_numbers<[1], [0], [0], [1], [0, 0, 1, 1], [], []>} : vector<8x32xbf16>, vector<32x32xbf16>, vector<8x32xf32> -> vector<8x32xf32>
      %c0_66 = arith.constant 0 : index
      %c0_67 = arith.constant 0 : index
      %75 = vector.load %arg7[%c0_66, %c0_67] : memref<1x32xf32, #tpu.memory_space<vmem>>, vector<1x32xf32>
      %76 = vector.broadcast %75 : vector<1x32xf32> to vector<8x32xf32>
      %77 = arith.addf %74, %76 : vector<8x32xf32>
      %78 = arith.truncf %77 : vector<8x32xf32> to vector<8x32xbf16>
      %c0_68 = arith.constant 0 : index
      %c0_69 = arith.constant 0 : index
      %c0_70 = arith.constant 0 : index
      %79 = vector.load %arg8[%c0_68, %c0_69, %c0_70] : memref<1x8x32xbf16, #tpu.memory_space<vmem>>, vector<1x8x32xbf16>
      %80 = vector.shape_cast %79 : vector<1x8x32xbf16> to vector<8x32xbf16>
      %81 = vector.shape_cast %78 : vector<8x32xbf16> to vector<1x8x32xbf16>
      tpu.vector_store %arg8[%c0_68, %c0_69, %c0_70], %81 {strides = array<i32>} : memref<1x8x32xbf16, #tpu.memory_space<vmem>>, vector<1x8x32xbf16>,
    } else {
    }
    return
  }
  func.func @transform_0(%arg0: i32, %arg1: i32, %arg2: i32) -> (i32, i32, i32, i32) {
    %c0_i32 = arith.constant 0 : i32
    %c0_i32_0 = arith.constant 0 : i32
    %c0_i32_1 = arith.constant 0 : i32
    return %arg0, %c0_i32, %arg1, %c0_i32_0 : i32, i32, i32, i32
  }
  func.func @transform_1(%arg0: i32, %arg1: i32, %arg2: i32) -> (i32, i32, i32, i32) {
    %c0_i32 = arith.constant 0 : i32
    %c0_i32_0 = arith.constant 0 : i32
    %c0_i32_1 = arith.constant 0 : i32
    return %arg0, %c0_i32, %arg2, %c0_i32_0 : i32, i32, i32, i32
  }
  func.func @transform_2(%arg0: i32, %arg1: i32, %arg2: i32) -> (i32, i32, i32, i32) {
    %c0_i32 = arith.constant 0 : i32
    %c0_i32_0 = arith.constant 0 : i32
    %c0_i32_1 = arith.constant 0 : i32
    return %arg0, %c0_i32, %arg2, %c0_i32_0 : i32, i32, i32, i32
  }
  func.func @transform_3(%arg0: i32, %arg1: i32, %arg2: i32) -> (i32, i32) {
    %c0_i32 = arith.constant 0 : i32
    %c0_i32_0 = arith.constant 0 : i32
    %c0_i32_1 = arith.constant 0 : i32
    return %c0_i32, %c0_i32_0 : i32, i32
  }
  func.func @transform_4(%arg0: i32, %arg1: i32, %arg2: i32) -> (i32, i32) {
    %c0_i32 = arith.constant 0 : i32
    %c0_i32_0 = arith.constant 0 : i32
    %c0_i32_1 = arith.constant 0 : i32
    return %c0_i32, %c0_i32_0 : i32, i32
  }
  func.func @transform_5(%arg0: i32, %arg1: i32, %arg2: i32) -> (i32, i32, i32) {
    %c0_i32 = arith.constant 0 : i32
    %c0_i32_0 = arith.constant 0 : i32
    return %arg0, %arg1, %c0_i32 : i32, i32, i32
  }
}

module attributes {stable_mosaic.version = 11 : i64} {
  func.func @_flash_mhsa_kernel(%arg0: i32, %arg1: i32, %arg2: i32, %arg3: memref<1x4x8x8xbf16, #tpu.memory_space<vmem>>, %arg4: memref<1x4x8x8xbf16, #tpu.memory_space<vmem>>, %arg5: memref<1x4x8x8xbf16, #tpu.memory_space<vmem>>, %arg6: memref<32x32xbf16, #tpu.memory_space<vmem>>, %arg7: memref<1x32xf32, #tpu.memory_space<vmem>>, %arg8: memref<1x8x32xbf16, #tpu.memory_space<vmem>>, %arg9: memref<4x8x1xf32, #tpu.memory_space<vmem>>, %arg10: memref<4x8x1xf32, #tpu.memory_space<vmem>>, %arg11: memref<4x8x8xf32, #tpu.memory_space<vmem>>, %arg12: memref<8x32xbf16, #tpu.memory_space<vmem>>) attributes {dimension_semantics = [#tpu.dimension_semantics<parallel>, #tpu.dimension_semantics<parallel>, #tpu.dimension_semantics<arbitrary>], iteration_bounds = array<i64: 2, 1, 1>, scalar_prefetch = 0 : i64, scratch_operands = 4 : i64, tpu.core_type = #tpu.core_type<tc>, window_params = [{transform_indices = @transform_0, window_bounds = array<i64: 1, 4, 8, 8>}, {transform_indices = @transform_1, window_bounds = array<i64: 1, 4, 8, 8>}, {transform_indices = @transform_2, window_bounds = array<i64: 1, 4, 8, 8>}, {pipeline_mode = #tpu.pipeline_mode<synchronous>, transform_indices = @transform_3, window_bounds = array<i64: 32, 32>}, {pipeline_mode = #tpu.pipeline_mode<synchronous>, transform_indices = @transform_4, window_bounds = array<i64: 1, 32>}, {transform_indices = @transform_5, window_bounds = array<i64: 1, 8, 32>}]} {
    %c0_i32 = arith.constant 0 : i32
    %0 = arith.cmpi eq, %arg2, %c0_i32 : i32
    %1 = arith.extui %0 : i1 to i32
    %c0_i32_0 = arith.constant 0 : i32
    %2 = arith.cmpi ne, %1, %c0_i32_0 : i32
    scf.if %2 {
      %cst_35 = arith.constant 0xFF800000 : f32
      %36 = vector.broadcast %cst_35 : f32 to vector<4x8x1xf32>
      %c0_36 = arith.constant 0 : index
      %c0_37 = arith.constant 0 : index
      %c0_38 = arith.constant 0 : index
      %37 = vector.load %arg9[%c0_36, %c0_37, %c0_38] : memref<4x8x1xf32, #tpu.memory_space<vmem>>, vector<4x8x1xf32>
      tpu.vector_store %arg9[%c0_36, %c0_37, %c0_38], %36 {strides = array<i32>} : memref<4x8x1xf32, #tpu.memory_space<vmem>>, vector<4x8x1xf32>,
      %cst_39 = arith.constant 0.000000e+00 : f32
      %38 = vector.broadcast %cst_39 : f32 to vector<4x8x1xf32>
      %c0_40 = arith.constant 0 : index
      %c0_41 = arith.constant 0 : index
      %c0_42 = arith.constant 0 : index
      %39 = vector.load %arg10[%c0_40, %c0_41, %c0_42] : memref<4x8x1xf32, #tpu.memory_space<vmem>>, vector<4x8x1xf32>
      tpu.vector_store %arg10[%c0_40, %c0_41, %c0_42], %38 {strides = array<i32>} : memref<4x8x1xf32, #tpu.memory_space<vmem>>, vector<4x8x1xf32>,
      %cst_43 = arith.constant 0.000000e+00 : f32
      %40 = vector.broadcast %cst_43 : f32 to vector<4x8x8xf32>
      %c0_44 = arith.constant 0 : index
      %c0_45 = arith.constant 0 : index
      %c0_46 = arith.constant 0 : index
      %41 = vector.load %arg11[%c0_44, %c0_45, %c0_46] : memref<4x8x8xf32, #tpu.memory_space<vmem>>, vector<4x8x8xf32>
      tpu.vector_store %arg11[%c0_44, %c0_45, %c0_46], %40 {strides = array<i32>} : memref<4x8x8xf32, #tpu.memory_space<vmem>>, vector<4x8x8xf32>,
    } else {
    }
    %c0 = arith.constant 0 : index
    %c0_1 = arith.constant 0 : index
    %c0_2 = arith.constant 0 : index
    %c0_3 = arith.constant 0 : index
    %3 = vector.load %arg3[%c0, %c0_1, %c0_2, %c0_3] : memref<1x4x8x8xbf16, #tpu.memory_space<vmem>>, vector<1x4x8x8xbf16>
    %4 = vector.shape_cast %3 : vector<1x4x8x8xbf16> to vector<4x8x8xbf16>
    %c0_4 = arith.constant 0 : index
    %c0_5 = arith.constant 0 : index
    %c0_6 = arith.constant 0 : index
    %c0_7 = arith.constant 0 : index
    %5 = vector.load %arg4[%c0_4, %c0_5, %c0_6, %c0_7] : memref<1x4x8x8xbf16, #tpu.memory_space<vmem>>, vector<1x4x8x8xbf16>
    %6 = vector.shape_cast %5 : vector<1x4x8x8xbf16> to vector<4x8x8xbf16>
    %c0_8 = arith.constant 0 : index
    %c0_9 = arith.constant 0 : index
    %c0_10 = arith.constant 0 : index
    %c0_11 = arith.constant 0 : index
    %7 = vector.load %arg5[%c0_8, %c0_9, %c0_10, %c0_11] : memref<1x4x8x8xbf16, #tpu.memory_space<vmem>>, vector<1x4x8x8xbf16>
    %8 = vector.shape_cast %7 : vector<1x4x8x8xbf16> to vector<4x8x8xbf16>
    %cst = arith.constant dense<0.000000e+00> : vector<4x8x8xf32>
    %9 = tpu.matmul %4, %6, %cst {dimension_numbers = #tpu.dot_dimension_numbers<[2], [2], [1], [1], [0, 0, 0, 1, 1, 1], [0], [0]>} : vector<4x8x8xbf16>, vector<4x8x8xbf16>, vector<4x8x8xf32> -> vector<4x8x8xf32>
    %c0_12 = arith.constant 0 : index
    %c0_13 = arith.constant 0 : index
    %c0_14 = arith.constant 0 : index
    %10 = vector.load %arg9[%c0_12, %c0_13, %c0_14] : memref<4x8x1xf32, #tpu.memory_space<vmem>>, vector<4x8x1xf32>
    %cst_15 = arith.constant dense<0xFF800000> : vector<4x8xf32>
    %11 = vector.multi_reduction <maximumf>, %9, %cst_15 [2] : vector<4x8x8xf32> to vector<4x8xf32>
    %12 = vector.shape_cast %11 : vector<4x8xf32> to vector<4x8x1xf32>
    %13 = arith.maximumf %10, %12 : vector<4x8x1xf32>
    %14 = arith.subf %10, %13 : vector<4x8x1xf32>
    %15 = math.exp %14 : vector<4x8x1xf32>
    %16 = vector.broadcast %13 : vector<4x8x1xf32> to vector<4x8x8xf32>
    %17 = arith.subf %9, %16 : vector<4x8x8xf32>
    %18 = math.exp %17 : vector<4x8x8xf32>
    %c0_16 = arith.constant 0 : index
    %c0_17 = arith.constant 0 : index
    %c0_18 = arith.constant 0 : index
    %19 = vector.load %arg10[%c0_16, %c0_17, %c0_18] : memref<4x8x1xf32, #tpu.memory_space<vmem>>, vector<4x8x1xf32>
    %20 = arith.mulf %15, %19 : vector<4x8x1xf32>
    %cst_19 = arith.constant dense<0.000000e+00> : vector<4x8xf32>
    %21 = vector.multi_reduction <add>, %18, %cst_19 [2] : vector<4x8x8xf32> to vector<4x8xf32>
    %22 = vector.shape_cast %21 : vector<4x8xf32> to vector<4x8x1xf32>
    %23 = arith.addf %20, %22 : vector<4x8x1xf32>
    %c0_20 = arith.constant 0 : index
    %c0_21 = arith.constant 0 : index
    %c0_22 = arith.constant 0 : index
    %24 = vector.load %arg10[%c0_20, %c0_21, %c0_22] : memref<4x8x1xf32, #tpu.memory_space<vmem>>, vector<4x8x1xf32>
    tpu.vector_store %arg10[%c0_20, %c0_21, %c0_22], %23 {strides = array<i32>} : memref<4x8x1xf32, #tpu.memory_space<vmem>>, vector<4x8x1xf32>,
    %25 = arith.truncf %18 : vector<4x8x8xf32> to vector<4x8x8xbf16>
    %cst_23 = arith.constant dense<0.000000e+00> : vector<4x8x8xf32>
    %26 = tpu.matmul %25, %8, %cst_23 {dimension_numbers = #tpu.dot_dimension_numbers<[2], [1], [1], [2], [0, 0, 0, 1, 1, 2], [0], [0]>} : vector<4x8x8xbf16>, vector<4x8x8xbf16>, vector<4x8x8xf32> -> vector<4x8x8xf32>
    %c0_24 = arith.constant 0 : index
    %c0_25 = arith.constant 0 : index
    %c0_26 = arith.constant 0 : index
    %27 = vector.load %arg11[%c0_24, %c0_25, %c0_26] : memref<4x8x8xf32, #tpu.memory_space<vmem>>, vector<4x8x8xf32>
    %28 = vector.broadcast %15 : vector<4x8x1xf32> to vector<4x8x8xf32>
    %29 = arith.mulf %28, %27 : vector<4x8x8xf32>
    %30 = arith.addf %29, %26 : vector<4x8x8xf32>
    %c0_27 = arith.constant 0 : index
    %c0_28 = arith.constant 0 : index
    %c0_29 = arith.constant 0 : index
    %31 = vector.load %arg11[%c0_27, %c0_28, %c0_29] : memref<4x8x8xf32, #tpu.memory_space<vmem>>, vector<4x8x8xf32>
    tpu.vector_store %arg11[%c0_27, %c0_28, %c0_29], %30 {strides = array<i32>} : memref<4x8x8xf32, #tpu.memory_space<vmem>>, vector<4x8x8xf32>,
    %c0_30 = arith.constant 0 : index
    %c0_31 = arith.constant 0 : index
    %c0_32 = arith.constant 0 : index
    %32 = vector.load %arg9[%c0_30, %c0_31, %c0_32] : memref<4x8x1xf32, #tpu.memory_space<vmem>>, vector<4x8x1xf32>
    tpu.vector_store %arg9[%c0_30, %c0_31, %c0_32], %13 {strides = array<i32>} : memref<4x8x1xf32, #tpu.memory_space<vmem>>, vector<4x8x1xf32>,
    %c0_i32_33 = arith.constant 0 : i32
    %33 = arith.cmpi eq, %arg2, %c0_i32_33 : i32
    %34 = arith.extui %33 : i1 to i32
    %c0_i32_34 = arith.constant 0 : i32
    %35 = arith.cmpi ne, %34, %c0_i32_34 : i32
    scf.if %35 {
      %c0_35 = arith.constant 0 : index
      %c0_36 = arith.constant 0 : index
      %c0_37 = arith.constant 0 : index
      %36 = vector.load %arg10[%c0_35, %c0_36, %c0_37] : memref<4x8x1xf32, #tpu.memory_space<vmem>>, vector<1x8x1xf32>
      %37 = vector.shape_cast %36 : vector<1x8x1xf32> to vector<8x1xf32>
      %38 = tpu.reciprocal %37 {approx = true} : vector<8x1xf32> -> vector<8x1xf32>
      %c0_38 = arith.constant 0 : index
      %c0_39 = arith.constant 0 : index
      %c0_40 = arith.constant 0 : index
      %39 = vector.load %arg11[%c0_38, %c0_39, %c0_40] : memref<4x8x8xf32, #tpu.memory_space<vmem>>, vector<1x8x8xf32>
      %40 = vector.shape_cast %39 : vector<1x8x8xf32> to vector<8x8xf32>
      %41 = vector.broadcast %38 : vector<8x1xf32> to vector<8x8xf32>
      %42 = arith.mulf %40, %41 : vector<8x8xf32>
      %43 = arith.truncf %42 : vector<8x8xf32> to vector<8x8xbf16>
      %c0_41 = arith.constant 0 : index
      %c0_42 = arith.constant 0 : index
      %44 = vector.load %arg12[%c0_41, %c0_42] : memref<8x32xbf16, #tpu.memory_space<vmem>>, vector<8x8xbf16>
      tpu.vector_store %arg12[%c0_41, %c0_42], %43 {strides = array<i32>} : memref<8x32xbf16, #tpu.memory_space<vmem>>, vector<8x8xbf16>,
      %c1 = arith.constant 1 : index
      %c0_43 = arith.constant 0 : index
      %c0_44 = arith.constant 0 : index
      %45 = vector.load %arg10[%c1, %c0_43, %c0_44] : memref<4x8x1xf32, #tpu.memory_space<vmem>>, vector<1x8x1xf32>
      %46 = vector.shape_cast %45 : vector<1x8x1xf32> to vector<8x1xf32>
      %47 = tpu.reciprocal %46 {approx = true} : vector<8x1xf32> -> vector<8x1xf32>
      %c1_45 = arith.constant 1 : index
      %c0_46 = arith.constant 0 : index
      %c0_47 = arith.constant 0 : index
      %48 = vector.load %arg11[%c1_45, %c0_46, %c0_47] : memref<4x8x8xf32, #tpu.memory_space<vmem>>, vector<1x8x8xf32>
      %49 = vector.shape_cast %48 : vector<1x8x8xf32> to vector<8x8xf32>
      %50 = vector.broadcast %47 : vector<8x1xf32> to vector<8x8xf32>
      %51 = arith.mulf %49, %50 : vector<8x8xf32>
      %52 = arith.truncf %51 : vector<8x8xf32> to vector<8x8xbf16>
      %c0_48 = arith.constant 0 : index
      %c8 = arith.constant 8 : index
      %53 = vector.load %arg12[%c0_48, %c8] : memref<8x32xbf16, #tpu.memory_space<vmem>>, vector<8x8xbf16>
      tpu.vector_store %arg12[%c0_48, %c8], %52 {strides = array<i32>} : memref<8x32xbf16, #tpu.memory_space<vmem>>, vector<8x8xbf16>,
      %c2 = arith.constant 2 : index
      %c0_49 = arith.constant 0 : index
      %c0_50 = arith.constant 0 : index
      %54 = vector.load %arg10[%c2, %c0_49, %c0_50] : memref<4x8x1xf32, #tpu.memory_space<vmem>>, vector<1x8x1xf32>
      %55 = vector.shape_cast %54 : vector<1x8x1xf32> to vector<8x1xf32>
      %56 = tpu.reciprocal %55 {approx = true} : vector<8x1xf32> -> vector<8x1xf32>
      %c2_51 = arith.constant 2 : index
      %c0_52 = arith.constant 0 : index
      %c0_53 = arith.constant 0 : index
      %57 = vector.load %arg11[%c2_51, %c0_52, %c0_53] : memref<4x8x8xf32, #tpu.memory_space<vmem>>, vector<1x8x8xf32>
      %58 = vector.shape_cast %57 : vector<1x8x8xf32> to vector<8x8xf32>
      %59 = vector.broadcast %56 : vector<8x1xf32> to vector<8x8xf32>
      %60 = arith.mulf %58, %59 : vector<8x8xf32>
      %61 = arith.truncf %60 : vector<8x8xf32> to vector<8x8xbf16>
      %c0_54 = arith.constant 0 : index
      %c16 = arith.constant 16 : index
      %62 = vector.load %arg12[%c0_54, %c16] : memref<8x32xbf16, #tpu.memory_space<vmem>>, vector<8x8xbf16>
      tpu.vector_store %arg12[%c0_54, %c16], %61 {strides = array<i32>} : memref<8x32xbf16, #tpu.memory_space<vmem>>, vector<8x8xbf16>,
      %c3 = arith.constant 3 : index
      %c0_55 = arith.constant 0 : index
      %c0_56 = arith.constant 0 : index
      %63 = vector.load %arg10[%c3, %c0_55, %c0_56] : memref<4x8x1xf32, #tpu.memory_space<vmem>>, vector<1x8x1xf32>
      %64 = vector.shape_cast %63 : vector<1x8x1xf32> to vector<8x1xf32>
      %65 = tpu.reciprocal %64 {approx = true} : vector<8x1xf32> -> vector<8x1xf32>
      %c3_57 = arith.constant 3 : index
      %c0_58 = arith.constant 0 : index
      %c0_59 = arith.constant 0 : index
      %66 = vector.load %arg11[%c3_57, %c0_58, %c0_59] : memref<4x8x8xf32, #tpu.memory_space<vmem>>, vector<1x8x8xf32>
      %67 = vector.shape_cast %66 : vector<1x8x8xf32> to vector<8x8xf32>
      %68 = vector.broadcast %65 : vector<8x1xf32> to vector<8x8xf32>
      %69 = arith.mulf %67, %68 : vector<8x8xf32>
      %70 = arith.truncf %69 : vector<8x8xf32> to vector<8x8xbf16>
      %c0_60 = arith.constant 0 : index
      %c24 = arith.constant 24 : index
      %71 = vector.load %arg12[%c0_60, %c24] : memref<8x32xbf16, #tpu.memory_space<vmem>>, vector<8x8xbf16>
      tpu.vector_store %arg12[%c0_60, %c24], %70 {strides = array<i32>} : memref<8x32xbf16, #tpu.memory_space<vmem>>, vector<8x8xbf16>,
      %c0_61 = arith.constant 0 : index
      %c0_62 = arith.constant 0 : index
      %72 = vector.load %arg12[%c0_61, %c0_62] : memref<8x32xbf16, #tpu.memory_space<vmem>>, vector<8x32xbf16>
      %c0_63 = arith.constant 0 : index
      %c0_64 = arith.constant 0 : index
      %73 = vector.load %arg6[%c0_63, %c0_64] : memref<32x32xbf16, #tpu.memory_space<vmem>>, vector<32x32xbf16>
      %cst_65 = arith.constant dense<0.000000e+00> : vector<8x32xf32>
      %74 = tpu.matmul %72, %73, %cst_65 {dimension_numbers = #tpu.dot_dimension_numbers<[1], [0], [0], [1], [0, 0, 1, 1], [], []>} : vector<8x32xbf16>, vector<32x32xbf16>, vector<8x32xf32> -> vector<8x32xf32>
      %c0_66 = arith.constant 0 : index
      %c0_67 = arith.constant 0 : index
      %75 = vector.load %arg7[%c0_66, %c0_67] : memref<1x32xf32, #tpu.memory_space<vmem>>, vector<1x32xf32>
      %76 = vector.broadcast %75 : vector<1x32xf32> to vector<8x32xf32>
      %77 = arith.addf %74, %76 : vector<8x32xf32>
      %78 = arith.truncf %77 : vector<8x32xf32> to vector<8x32xbf16>
      %c0_68 = arith.constant 0 : index
      %c0_69 = arith.constant 0 : index
      %c0_70 = arith.constant 0 : index
      %79 = vector.load %arg8[%c0_68, %c0_69, %c0_70] : memref<1x8x32xbf16, #tpu.memory_space<vmem>>, vector<1x8x32xbf16>
      %80 = vector.shape_cast %79 : vector<1x8x32xbf16> to vector<8x32xbf16>
      %81 = vector.shape_cast %78 : vector<8x32xbf16> to vector<1x8x32xbf16>
      tpu.vector_store %arg8[%c0_68, %c0_69, %c0_70], %81 {strides = array<i32>} : memref<1x8x32xbf16, #tpu.memory_space<vmem>>, vector<1x8x32xbf16>,
    } else {
    }
    return
  }
  func.func @transform_0(%arg0: i32, %arg1: i32, %arg2: i32) -> (i32, i32, i32, i32) {
    %c0_i32 = arith.constant 0 : i32
    %c0_i32_0 = arith.constant 0 : i32
    %c0_i32_1 = arith.constant 0 : i32
    return %arg0, %c0_i32, %arg1, %c0_i32_0 : i32, i32, i32, i32
  }
  func.func @transform_1(%arg0: i32, %arg1: i32, %arg2: i32) -> (i32, i32, i32, i32) {
    %c0_i32 = arith.constant 0 : i32
    %c0_i32_0 = arith.constant 0 : i32
    %c0_i32_1 = arith.constant 0 : i32
    return %arg0, %c0_i32, %arg2, %c0_i32_0 : i32, i32, i32, i32
  }
  func.func @transform_2(%arg0: i32, %arg1: i32, %arg2: i32) -> (i32, i32, i32, i32) {
    %c0_i32 = arith.constant 0 : i32
    %c0_i32_0 = arith.constant 0 : i32
    %c0_i32_1 = arith.constant 0 : i32
    return %arg0, %c0_i32, %arg2, %c0_i32_0 : i32, i32, i32, i32
  }
  func.func @transform_3(%arg0: i32, %arg1: i32, %arg2: i32) -> (i32, i32) {
    %c0_i32 = arith.constant 0 : i32
    %c0_i32_0 = arith.constant 0 : i32
    %c0_i32_1 = arith.constant 0 : i32
    return %c0_i32, %c0_i32_0 : i32, i32
  }
  func.func @transform_4(%arg0: i32, %arg1: i32, %arg2: i32) -> (i32, i32) {
    %c0_i32 = arith.constant 0 : i32
    %c0_i32_0 = arith.constant 0 : i32
    %c0_i32_1 = arith.constant 0 : i32
    return %c0_i32, %c0_i32_0 : i32, i32
  }
  func.func @transform_5(%arg0: i32, %arg1: i32, %arg2: i32) -> (i32, i32, i32) {
    %c0_i32 = arith.constant 0 : i32
    %c0_i32_0 = arith.constant 0 : i32
    return %arg0, %arg1, %c0_i32 : i32, i32, i32
  }
}

</mosaic_0001>

<llo_original>
// kernel: tpu_custom_call.1
$region0: #{tpu_custom_call.1}
  #allocation0 [shape = 'u32[]', space=smem, size = 0x4, offset = 0x4, fixed_abs, tag = 'smem constant byte address 0x4 - core index']
  #allocation1 [shape = 'u32[144,128]{1,0:T(1,128)}', space=vmem, size = 0x12000, scoped, tag = 'internal scratch']
  #allocation2 [shape = 'f32[4,8,1]{2,1,0:T(8,128)}', space=vmem, size = 0x4000, scoped, tag = 'scratch operand']
  #allocation3 [shape = 'f32[4,8,1]{2,1,0:T(8,128)}', space=vmem, size = 0x4000, scoped, tag = 'scratch operand']
  #allocation4 [shape = 'f32[4,8,8]{2,1,0:T(8,128)}', space=vmem, size = 0x4000, scoped, tag = 'scratch operand']
  #allocation5 [shape = 'bf16[8,32]{1,0:T(8,128)(2,1)}', space=vmem, size = 0x800, scoped, tag = 'scratch operand']
  %s0 = inlined_call_operand.hbm [shape: bf16[2,4,8,8], index: 0, kind: input, shape index: {}]
  %s1 = inlined_call_operand.hbm [shape: bf16[2,4,8,8], index: 1, kind: input, shape index: {}]
  %s2 = inlined_call_operand.hbm [shape: bf16[2,4,8,8], index: 2, kind: input, shape index: {}]
  %s3 = inlined_call_operand.hbm [shape: bf16[32,32], index: 3, kind: input, shape index: {}]
  %s4 = inlined_call_operand.vmem [shape: f32[1,32], index: 4, kind: input, shape index: {}]
  %s5 = inlined_call_operand.hbm [shape: bf16[2,8,32], index: 5, kind: output, shape index: {}]
  %s6 = sld [smem:[#allocation0]]
  $region77: #{tpu_custom_call.1} parent=0
    _
  %s8 = ssub.s32 1, %s6
  %s9 = scalar_select 0, %s8, %s6
  $region1: #{tpu_custom_call.1} parent=0
    #allocation6 [shape = 'u8[16384]{0}', space=vmem, size = 0x4000, scoped, tag = 'input window, operand 0']
    #allocation7 [shape = 's32[2]{0}', space=sflag, size = 0x8, scoped, tag = 'scoped memory for tpu_custom_call.1']
    #allocation8 [shape = 's32[2]{0}', space=sflag, size = 0x8, scoped, tag = 'scoped memory for tpu_custom_call.1']
    #allocation9 [shape = 'u8[16384]{0}', space=vmem, size = 0x4000, scoped, tag = 'input window, operand 1']
    #allocation10 [shape = 's32[2]{0}', space=sflag, size = 0x8, scoped, tag = 'scoped memory for tpu_custom_call.1']
    #allocation11 [shape = 'u8[16384]{0}', space=vmem, size = 0x4000, scoped, tag = 'input window, operand 2']
    #allocation12 [shape = 'u8[8192]{0}', space=vmem, size = 0x2000, scoped, tag = 'input window, operand 3, single buffered']
    #allocation13 [shape = 's32[1]{0}', space=sflag, size = 0x4, scoped, tag = 'scoped memory for tpu_custom_call.1']
    #allocation14 [shape = 'u8[4096]{0}', space=vmem, size = 0x1000, scoped, tag = 'output window, operand 0']
    %10 = vsyncpa [#allocation7], 0
    %s11 = scalar_lea.sflag [#allocation7], 1
    %12 = vsyncpa %s11, 0
    %13 = vsyncpa [#allocation10], 0
    %s14 = scalar_lea.sflag [#allocation10], 1
    %15 = vsyncpa %s14, 0
    %16 = vsyncpa [#allocation13], 0
    %17 = vsyncpa [#allocation8], 0
    %s18 = scalar_lea.sflag [#allocation8], 1
    %19 = vsyncpa %s18, 0
    loop: start=0, step=1, limit=4
    $region2: #{tpu_custom_call.1} parent=1 // loop_pre_header
      _
    $region3: #{tpu_custom_call.1} parent=1 // loop_header
      %s21 = sphi 0, %s25
      %p22 = scmp.ge.s32.totalorder %s21, 4
      %s28 = sphi 0, %s47
      %s29 = sphi 0, %s43
      %s30 = sphi 0, %s39
      %s31 = sphi 0, %s28
      %s32 = sphi 0, %s29
      %s33 = sphi 0, %s30
      %s34 = sphi 0, %s31
      %s35 = sphi 0, %s32
      %s36 = sphi 0, %s33
      %s52 = sphi 0, %s54
      %s55 = sphi 0, %s52
      %s56 = sphi 0, %s55
      %s72 = sphi 0, %s56
      %s80 = sphi 0, %s82
      %s83 = sphi 0, %s80
      %s84 = sphi 0, %s83
      %s100 = sphi 0, %s84
      %s108 = sphi 0, %s110
      %s111 = sphi 0, %s108
      %s112 = sphi 0, %s111
      %s128 = sphi 0, %s112
      %s132 = sphi 0, %s132
      %s134 = sphi 0, %s132
      %s135 = sphi 0, %s134
      %s149 = sphi 0, %s135
      %s153 = sphi 0, %s153
      %s155 = sphi 0, %s153
      %s156 = sphi 0, %s155
      %s170 = sphi 0, %s156
      %s178 = sphi 0, %s180
      %s181 = sphi 0, %s178
      %s182 = sphi 0, %s181
      %s198 = sphi 0, %s182
    $region4: #{tpu_custom_call.1} parent=1 // loop_header_branch
      %24 = sbr.rel (%p22) target = $region8
    $region5: #{tpu_custom_call.1} parent=1 // loop_body
      %s26 = ssub.s32 %s21, 1
      %s27 = ssub.s32 %s21, 2
      %s37 = sadd.s32 1, %s30
      %p38 = scmp.ge.s32.totalorder %s37, 1
      %s39 = scalar_select %p38, 0, %s37
      %s40 = sadd.s32 1, %s29
      %s41 = scalar_select %p38, %s40, %s29
      %p42 = scmp.ge.s32.totalorder %s41, 1
      %s43 = scalar_select %p42, 0, %s41
      %s44 = sadd.s32 1, %s28
      %s45 = scalar_select %p42, %s44, %s28
      %p46 = scmp.ge.s32.totalorder %s45, 2
      %s47 = scalar_select %p46, 0, %s45
      %s48 = ssub.s32 %s28, %s47
      %s49 = ssub.s32 %s29, %s43
      %s50 = sor.u32 %s48, %s49
      %p51 = scmp.eq.s32.totalorder %s50, 0
      %s53 = sadd.s32 %s52, 1
      %s54 = scalar_select %p51, %s52, %s53
      %p57 = pneg %p51
      %p58 = scmp.eq.s32.totalorder %s21, 1
      %p59 = por %p57, %p58
      %p60 = scmp.ne.s32.totalorder %s52, %s55
      %p61 = scmp.eq.s32.totalorder %s21, 0
      %p62 = por %p60, %p61
      %p63 = scmp.ne.s32.totalorder %s52, %s55
      %p64 = scmp.eq.s32.totalorder %s26, 1
      %p65 = por %p63, %p64
      %p66 = scmp.ne.s32.totalorder %s55, %s56
      %p67 = scmp.eq.s32.totalorder %s26, 0
      %p68 = por %p66, %p67
      %p69 = scmp.ne.s32.totalorder %s55, %s56
      %p70 = scmp.eq.s32.totalorder %s27, 1
      %p71 = por %p69, %p70
      %p73 = scmp.ne.s32.totalorder %s56, %s72
      %p74 = scmp.eq.s32.totalorder %s27, 0
      %p75 = por %p73, %p74
      %s76 = ssub.s32 %s28, %s47
      %s77 = ssub.s32 %s30, %s39
      %s78 = sor.u32 %s76, %s77
      %p79 = scmp.eq.s32.totalorder %s78, 0
      %s81 = sadd.s32 %s80, 1
      %s82 = scalar_select %p79, %s80, %s81
      %p85 = pneg %p79
      %p86 = scmp.eq.s32.totalorder %s21, 1
      %p87 = por %p85, %p86
      %p88 = scmp.ne.s32.totalorder %s80, %s83
      %p89 = scmp.eq.s32.totalorder %s21, 0
      %p90 = por %p88, %p89
      %p91 = scmp.ne.s32.totalorder %s80, %s83
      %p92 = scmp.eq.s32.totalorder %s26, 1
      %p93 = por %p91, %p92
      %p94 = scmp.ne.s32.totalorder %s83, %s84
      %p95 = scmp.eq.s32.totalorder %s26, 0
      %p96 = por %p94, %p95
      %p97 = scmp.ne.s32.totalorder %s83, %s84
      %p98 = scmp.eq.s32.totalorder %s27, 1
      %p99 = por %p97, %p98
      %p101 = scmp.ne.s32.totalorder %s84, %s100
      %p102 = scmp.eq.s32.totalorder %s27, 0
      %p103 = por %p101, %p102
      %s104 = ssub.s32 %s28, %s47
      %s105 = ssub.s32 %s30, %s39
      %s106 = sor.u32 %s104, %s105
      %p107 = scmp.eq.s32.totalorder %s106, 0
      %s109 = sadd.s32 %s108, 1
      %s110 = scalar_select %p107, %s108, %s109
      %p113 = pneg %p107
      %p114 = scmp.eq.s32.totalorder %s21, 1
      %p115 = por %p113, %p114
      %p116 = scmp.ne.s32.totalorder %s108, %s111
      %p117 = scmp.eq.s32.totalorder %s21, 0
      %p118 = por %p116, %p117
      %p119 = scmp.ne.s32.totalorder %s108, %s111
      %p120 = scmp.eq.s32.totalorder %s26, 1
      %p121 = por %p119, %p120
      %p122 = scmp.ne.s32.totalorder %s111, %s112
      %p123 = scmp.eq.s32.totalorder %s26, 0
      %p124 = por %p122, %p123
      %p125 = scmp.ne.s32.totalorder %s111, %s112
      %p126 = scmp.eq.s32.totalorder %s27, 1
      %p127 = por %p125, %p126
      %p129 = scmp.ne.s32.totalorder %s112, %s128
      %p130 = scmp.eq.s32.totalorder %s27, 0
      %p131 = por %p129, %p130
      %s133 = sadd.s32 %s132, 1
      %p136 = scmp.eq.s32.totalorder %s21, 1
      %p137 = scmp.ne.s32.totalorder %s132, %s134
      %p138 = scmp.eq.s32.totalorder %s21, 0
      %p139 = por %p137, %p138
      %p140 = scmp.ne.s32.totalorder %s132, %s134
      %p141 = scmp.eq.s32.totalorder %s26, 1
      %p142 = por %p140, %p141
      %p143 = scmp.ne.s32.totalorder %s134, %s135
      %p144 = scmp.eq.s32.totalorder %s26, 0
      %p145 = por %p143, %p144
      %p146 = scmp.ne.s32.totalorder %s134, %s135
      %p147 = scmp.eq.s32.totalorder %s27, 1
      %p148 = por %p146, %p147
      %p150 = scmp.ne.s32.totalorder %s135, %s149
      %p151 = scmp.eq.s32.totalorder %s27, 0
      %p152 = por %p150, %p151
      %s154 = sadd.s32 %s153, 1
      %p157 = scmp.eq.s32.totalorder %s21, 1
      %p158 = scmp.ne.s32.totalorder %s153, %s155
      %p159 = scmp.eq.s32.totalorder %s21, 0
      %p160 = por %p158, %p159
      %p161 = scmp.ne.s32.totalorder %s153, %s155
      %p162 = scmp.eq.s32.totalorder %s26, 1
      %p163 = por %p161, %p162
      %p164 = scmp.ne.s32.totalorder %s155, %s156
      %p165 = scmp.eq.s32.totalorder %s26, 0
      %p166 = por %p164, %p165
      %p167 = scmp.ne.s32.totalorder %s155, %s156
      %p168 = scmp.eq.s32.totalorder %s27, 1
      %p169 = por %p167, %p168
      %p171 = scmp.ne.s32.totalorder %s156, %s170
      %p172 = scmp.eq.s32.totalorder %s27, 0
      %p173 = por %p171, %p172
      %s174 = ssub.s32 %s28, %s47
      %s175 = ssub.s32 %s29, %s43
      %s176 = sor.u32 %s174, %s175
      %p177 = scmp.eq.s32.totalorder %s176, 0
      %s179 = sadd.s32 %s178, 1
      %s180 = scalar_select %p177, %s178, %s179
      %p183 = pneg %p177
      %p184 = scmp.eq.s32.totalorder %s21, 1
      %p185 = por %p183, %p184
      %p186 = scmp.ne.s32.totalorder %s178, %s181
      %p187 = scmp.eq.s32.totalorder %s21, 0
      %p188 = por %p186, %p187
      %p189 = scmp.ne.s32.totalorder %s178, %s181
      %p190 = scmp.eq.s32.totalorder %s26, 1
      %p191 = por %p189, %p190
      %p192 = scmp.ne.s32.totalorder %s181, %s182
      %p193 = scmp.eq.s32.totalorder %s26, 0
      %p194 = por %p192, %p193
      %p195 = scmp.ne.s32.totalorder %s181, %s182
      %p196 = scmp.eq.s32.totalorder %s27, 1
      %p197 = por %p195, %p196
      %p199 = scmp.ne.s32.totalorder %s182, %s198
      %p200 = scmp.eq.s32.totalorder %s27, 0
      %p201 = por %p199, %p200
      %p202 = scmp.le.s32.totalorder 1, %s21
      %p203 = scmp.lt.s32.totalorder %s21, 3
      %p204 = pnand %p202, %p203
      %p205 = pneg %p204
      // Predicated region
      $region9: #{tpu_custom_call.1} parent=5 // pred_check
        _
      $region10: #{tpu_custom_call.1} parent=5 // pred_check_branch
        %207 = sbr.rel (%p204) target = $region12
      $region11: #{tpu_custom_call.1} parent=5 // pred_region
        %s208 = ssub.s32 %s21, 1
        // Predicated region
        $region13: #{tpu_custom_call.1} parent=11 // pred_check
          %p209 = pneg %p145
        $region14: #{tpu_custom_call.1} parent=11 // pred_check_branch
          %211 = sbr.rel (%p209) target = $region16
        $region15: #{tpu_custom_call.1} parent=11 // pred_region
          %s213 = ssub.s32 256, 256
          %214 = vsyncadd [#allocation13], %s213
          %s215 = sshll.u32 [#allocation12], 4
          %s216 = int_to_ptr.vmem [resolvable:$true] %s215
          %221 = dma.hbm_to_vmem [thread:$0]  %s3, 256, %s216, [#allocation13], 64, 64, 4
        $region16: #{tpu_custom_call.1} parent=11 // pred_fallthru
          _
        // Predicated region
        $region17: #{tpu_custom_call.1} parent=11 // pred_check
          %p222 = pneg %p166
        $region18: #{tpu_custom_call.1} parent=11 // pred_check_branch
          %224 = sbr.rel (%p222) target = $region20
        $region19: #{tpu_custom_call.1} parent=11 // pred_region
          _
        $region20: #{tpu_custom_call.1} parent=11 // pred_fallthru
          _
      $region12: #{tpu_custom_call.1} parent=5 // pred_fallthru
        _
      %p225 = scmp.lt.s32.totalorder %s21, 2
      // Predicated region
      $region21: #{tpu_custom_call.1} parent=5 // pred_check
        %p226 = pneg %p225
      $region22: #{tpu_custom_call.1} parent=5 // pred_check_branch
        %228 = sbr.rel (%p226) target = $region24
      $region23: #{tpu_custom_call.1} parent=5 // pred_region
        // Predicated region
        $region25: #{tpu_custom_call.1} parent=23 // pred_check
          %p229 = pneg %p62
        $region26: #{tpu_custom_call.1} parent=23 // pred_check_branch
          %231 = sbr.rel (%p229) target = $region28
        $region27: #{tpu_custom_call.1} parent=23 // pred_region
          %s232 = sand.u32 %s52, 1
          %s233 = scalar_lea.sflag [#allocation7], %s232
          %s234 = sand.u32 %s52, 1
          %s235 = smul.addr %s234, 16
          %s236 = scalar_lea.vmem [#allocation6], %s235
          %s238 = ssub.s32 256, 256
          %239 = vsyncadd %s233, %s238
          %s240 = smul.addr %s28, 4
          %s241 = sadd.s32 %s29, %s240
          %s242 = smul.addr %s241, 64
          %s243 = scalar_lea.hbm %s0, %s242
          %s244 = sshll.u32 %s236, 4
          %s245 = int_to_ptr.vmem [resolvable:$true] %s244
          %250 = dma.hbm_to_vmem [thread:$0]  %s243, 256, %s245, %s233, 64, 64, 4
        $region28: #{tpu_custom_call.1} parent=23 // pred_fallthru
          _
        // Predicated region
        $region29: #{tpu_custom_call.1} parent=23 // pred_check
          %p251 = pneg %p90
        $region30: #{tpu_custom_call.1} parent=23 // pred_check_branch
          %253 = sbr.rel (%p251) target = $region32
        $region31: #{tpu_custom_call.1} parent=23 // pred_region
          %s254 = sand.u32 %s21, 1
          %s255 = scalar_lea.sflag [#allocation10], %s254
          %s256 = sand.u32 %s80, 1
          %s257 = smul.addr %s256, 16
          %s258 = scalar_lea.vmem [#allocation9], %s257
          %s260 = ssub.s32 256, 256
          %261 = vsyncadd %s255, %s260
          %s262 = smul.addr %s28, 4
          %s263 = sadd.s32 %s30, %s262
          %s264 = smul.addr %s263, 64
          %s265 = scalar_lea.hbm %s1, %s264
          %s266 = sshll.u32 %s258, 4
          %s267 = int_to_ptr.vmem [resolvable:$true] %s266
          %272 = dma.hbm_to_vmem [thread:$0]  %s265, 256, %s267, %s255, 64, 64, 4
        $region32: #{tpu_custom_call.1} parent=23 // pred_fallthru
          _
        // Predicated region
        $region33: #{tpu_custom_call.1} parent=23 // pred_check
          %p273 = pneg %p118
        $region34: #{tpu_custom_call.1} parent=23 // pred_check_branch
          %275 = sbr.rel (%p273) target = $region36
        $region35: #{tpu_custom_call.1} parent=23 // pred_region
          %s276 = sand.u32 %s21, 1
          %s277 = scalar_lea.sflag [#allocation10], %s276
          %s278 = sand.u32 %s108, 1
          %s279 = smul.addr %s278, 16
          %s280 = scalar_lea.vmem [#allocation11], %s279
          %s282 = ssub.s32 256, 256
          %283 = vsyncadd %s277, %s282
          %s284 = smul.addr %s28, 4
          %s285 = sadd.s32 %s30, %s284
          %s286 = smul.addr %s285, 64
          %s287 = scalar_lea.hbm %s2, %s286
          %s288 = sshll.u32 %s280, 4
          %s289 = int_to_ptr.vmem [resolvable:$true] %s288
          %294 = dma.hbm_to_vmem [thread:$0]  %s287, 256, %s289, %s277, 64, 64, 4
        $region36: #{tpu_custom_call.1} parent=23 // pred_fallthru
          _
      $region24: #{tpu_custom_call.1} parent=5 // pred_fallthru
        _
      %p295 = scmp.le.s32.totalorder 1, %s21
      %p296 = scmp.lt.s32.totalorder %s21, 3
      %p297 = pnand %p295, %p296
      %p298 = pneg %p297
      // Predicated region
      $region37: #{tpu_custom_call.1} parent=5 // pred_check
        _
      $region38: #{tpu_custom_call.1} parent=5 // pred_check_branch
        %300 = sbr.rel (%p297) target = $region40
      $region39: #{tpu_custom_call.1} parent=5 // pred_region
        %s301 = ssub.s32 %s21, 1
        %s302 = sand.u32 %s55, 1
        %s303 = scalar_lea.sflag [#allocation7], %s302
        %s304 = sand.u32 %s55, 1
        %s305 = smul.addr %s304, 16
        %s306 = scalar_lea.vmem [#allocation6], %s305
        // Predicated region
        $region41: #{tpu_custom_call.1} parent=39 // pred_check
          %p307 = pneg %p68
        $region42: #{tpu_custom_call.1} parent=39 // pred_check_branch
          %309 = sbr.rel (%p307) target = $region44
        $region43: #{tpu_custom_call.1} parent=39 // pred_region
          %310 = dma.done %s303, 256
        $region44: #{tpu_custom_call.1} parent=39 // pred_fallthru
          _
        %s311 = sand.u32 %s26, 1
        %s312 = scalar_lea.sflag [#allocation10], %s311
        %s313 = sand.u32 %s83, 1
        %s314 = smul.addr %s313, 16
        %s315 = scalar_lea.vmem [#allocation9], %s314
        // Predicated region
        $region45: #{tpu_custom_call.1} parent=39 // pred_check
          %p316 = pneg %p96
        $region46: #{tpu_custom_call.1} parent=39 // pred_check_branch
          %318 = sbr.rel (%p316) target = $region48
        $region47: #{tpu_custom_call.1} parent=39 // pred_region
          %319 = dma.done %s312, 256
        $region48: #{tpu_custom_call.1} parent=39 // pred_fallthru
          _
        %s320 = sand.u32 %s26, 1
        %s321 = scalar_lea.sflag [#allocation10], %s320
        %s322 = sand.u32 %s111, 1
        %s323 = smul.addr %s322, 16
        %s324 = scalar_lea.vmem [#allocation11], %s323
        // Predicated region
        $region49: #{tpu_custom_call.1} parent=39 // pred_check
          %p325 = pneg %p124
        $region50: #{tpu_custom_call.1} parent=39 // pred_check_branch
          %327 = sbr.rel (%p325) target = $region52
        $region51: #{tpu_custom_call.1} parent=39 // pred_region
          %328 = dma.done %s321, 256
        $region52: #{tpu_custom_call.1} parent=39 // pred_fallthru
          _
        // Predicated region
        $region53: #{tpu_custom_call.1} parent=39 // pred_check
          %p329 = pneg %p145
        $region54: #{tpu_custom_call.1} parent=39 // pred_check_branch
          %331 = sbr.rel (%p329) target = $region56
        $region55: #{tpu_custom_call.1} parent=39 // pred_region
          %332 = dma.done [#allocation13], 256
        $region56: #{tpu_custom_call.1} parent=39 // pred_fallthru
          _
        %s333 = sand.u32 %s55, 1
        %s334 = scalar_lea.sflag [#allocation7], %s333
        %s335 = sand.u32 %s55, 1
        %s336 = smul.addr %s335, 16
        %s337 = scalar_lea.vmem [#allocation6], %s336
        %p338 = pneg %p68
        %p339 = pneg %p65
        %s340 = sand.u32 %s26, 1
        %s341 = scalar_lea.sflag [#allocation10], %s340
        %s342 = sand.u32 %s83, 1
        %s343 = smul.addr %s342, 16
        %s344 = scalar_lea.vmem [#allocation9], %s343
        %p345 = pneg %p96
        %p346 = pneg %p93
        %s347 = sand.u32 %s26, 1
        %s348 = scalar_lea.sflag [#allocation10], %s347
        %s349 = sand.u32 %s111, 1
        %s350 = smul.addr %s349, 16
        %s351 = scalar_lea.vmem [#allocation11], %s350
        %p352 = pneg %p124
        %p353 = pneg %p121
        %p354 = pneg %p145
        %p355 = pneg %p142
        %p356 = pneg %p166
        %p357 = pneg %p163
        %p358 = pneg %p194
        %p359 = pneg %p191
        %s360 = sand.u32 %s181, 1
        %s361 = scalar_lea.sflag [#allocation8], %s360
        %s362 = sand.u32 %s181, 1
        %s363 = smul.addr %s362, 4
        %s364 = scalar_lea.vmem [#allocation14], %s363
        %p366 = scmp.eq.s32.totalorder %s33, 0
        // Predicated region
        $region57: #{tpu_custom_call.1} parent=39 // pred_check
          %p367 = pneg %p366
        $region58: #{tpu_custom_call.1} parent=39 // pred_check_branch
          %369 = sbr.rel (%p367) target = $region60
        $region59: #{tpu_custom_call.1} parent=39 // pred_region
          %vm370 = vcmask 7168
          %371 = vst.msk [vmem:[#allocation2] sm:$0xff] %vm370, -inf
          %372 = vst.msk [vmem:[#allocation2 + $0x8] sm:$0xff] %vm370, -inf
          %373 = vst.msk [vmem:[#allocation2 + $0x10] sm:$0xff] %vm370, -inf
          %374 = vst.msk [vmem:[#allocation2 + $0x18] sm:$0xff] %vm370, -inf
          %375 = vst.msk [vmem:[#allocation3] sm:$0xff] %vm370, 0.0
          %376 = vst.msk [vmem:[#allocation3 + $0x8] sm:$0xff] %vm370, 0.0
          %377 = vst.msk [vmem:[#allocation3 + $0x10] sm:$0xff] %vm370, 0.0
          %378 = vst.msk [vmem:[#allocation3 + $0x18] sm:$0xff] %vm370, 0.0
          %vm379 = vcmask 64512
          %380 = vst.msk [vmem:[#allocation4] sm:$0xff] %vm379, 0.0
          %381 = vst.msk [vmem:[#allocation4 + $0x8] sm:$0xff] %vm379, 0.0
          %382 = vst.msk [vmem:[#allocation4 + $0x10] sm:$0xff] %vm379, 0.0
          %383 = vst.msk [vmem:[#allocation4 + $0x18] sm:$0xff] %vm379, 0.0
        $region60: #{tpu_custom_call.1} parent=39 // pred_fallthru
          _
        %v384 = vld [vmem:[%s306] sm:$0xf]
        %v385 = vld [vmem:[%s306 + $0x4] sm:$0xf]
        %v386 = vld [vmem:[%s306 + $0x8] sm:$0xf]
        %v387 = vld [vmem:[%s306 + $0xc] sm:$0xf]
        %v388 = vld [vmem:[%s315] sm:$0xf]
        %v389 = vld [vmem:[%s315 + $0x4] sm:$0xf]
        %v390 = vld [vmem:[%s315 + $0x8] sm:$0xf]
        %v391 = vld [vmem:[%s315 + $0xc] sm:$0xf]
        %v392 = vld [vmem:[%s324] sm:$0xf]
        %v393 = vld [vmem:[%s324 + $0x4] sm:$0xf]
        %v394 = vld [vmem:[%s324 + $0x8] sm:$0xf]
        %v395 = vld [vmem:[%s324 + $0xc] sm:$0xf]
        %vm396 = vcmask 64512
        %v398 = vsel %vm396, %v384, 0
        %v401 = vsel %vm396, %v388, 0
        %403 = vmatprep.subr.bf16.mxu0 0
        %404 = vmatpush1.bf16.xpose.msra.mxu0 %v401
        %405 = vmatprep.subr.bf16.mxu0 0
        %406 = vmatpush1.bf16.xpose.msra.mxu0 0
        %407 = vmatprep.subr.bf16.mxu0 0
        %408 = vmatpush1.bf16.xpose.msra.mxu0 0
        %409 = vmatprep.subr.bf16.mxu0 0
        %410 = vmatpush1.bf16.xpose.msra.mxu0 0
        %411 = vmatprep.subr.bf16.mxu0 0
        %412 = vmatpush1.bf16.xpose.msra.mxu0 0
        %413 = vmatprep.subr.bf16.mxu0 0
        %414 = vmatpush1.bf16.xpose.msra.mxu0 0
        %415 = vmatprep.subr.bf16.mxu0 0
        %416 = vmatpush1.bf16.xpose.msra.mxu0 0
        %417 = vmatprep.subr.bf16.mxu0 0
        %418 = vmatpush1.bf16.xpose.msra.mxu0 0
        %419 = vmatprep.subr.bf16.mxu0 0
        %420 = vmatpush1.bf16.xpose.msra.mxu0 0
        %421 = vmatprep.subr.bf16.mxu0 0
        %422 = vmatpush1.bf16.xpose.msra.mxu0 0
        %423 = vmatprep.subr.bf16.mxu0 0
        %424 = vmatpush1.bf16.xpose.msra.mxu0 0
        %425 = vmatprep.subr.bf16.mxu0 0
        %426 = vmatpush1.bf16.xpose.msra.mxu0 0
        %427 = vmatprep.subr.bf16.mxu0 0
        %428 = vmatpush1.bf16.xpose.msra.mxu0 0
        %429 = vmatprep.subr.bf16.mxu0 0
        %430 = vmatpush1.bf16.xpose.msra.mxu0 0
        %431 = vmatprep.subr.bf16.mxu0 0
        %432 = vmatpush1.bf16.xpose.msra.mxu0 0
        %433 = vmatprep.subr.bf16.mxu0 0
        %434 = vmatpush1.bf16.xpose.msra.mxu0 0
        %435 = vmatprep.mubr.bf16.mxu0 0
        %436 = vmatmul.mubr.bf16.gmra.mrb[0].mxu0 %v398
        %v437 = vpop.f32.mrb[0].mxu0
        %v438 = vadd.f32 0.0, %v437
        %v439 = vpop.f32.mrb[0].mxu0
        %v440 = vpop.f32.mrb[0].mxu0
        %v441 = vpop.f32.mrb[0].mxu0
        %442 = vdwg.mxu0
        %v444 = vsel %vm396, %v385, 0
        %v447 = vsel %vm396, %v389, 0
        %449 = vmatprep.subr.bf16.mxu0 0
        %450 = vmatpush1.bf16.xpose.msra.mxu0 %v447
        %451 = vmatprep.subr.bf16.mxu0 0
        %452 = vmatpush1.bf16.xpose.msra.mxu0 0
        %453 = vmatprep.subr.bf16.mxu0 0
        %454 = vmatpush1.bf16.xpose.msra.mxu0 0
        %455 = vmatprep.subr.bf16.mxu0 0
        %456 = vmatpush1.bf16.xpose.msra.mxu0 0
        %457 = vmatprep.subr.bf16.mxu0 0
        %458 = vmatpush1.bf16.xpose.msra.mxu0 0
        %459 = vmatprep.subr.bf16.mxu0 0
        %460 = vmatpush1.bf16.xpose.msra.mxu0 0
        %461 = vmatprep.subr.bf16.mxu0 0
        %462 = vmatpush1.bf16.xpose.msra.mxu0 0
        %463 = vmatprep.subr.bf16.mxu0 0
        %464 = vmatpush1.bf16.xpose.msra.mxu0 0
        %465 = vmatprep.subr.bf16.mxu0 0
        %466 = vmatpush1.bf16.xpose.msra.mxu0 0
        %467 = vmatprep.subr.bf16.mxu0 0
        %468 = vmatpush1.bf16.xpose.msra.mxu0 0
        %469 = vmatprep.subr.bf16.mxu0 0
        %470 = vmatpush1.bf16.xpose.msra.mxu0 0
        %471 = vmatprep.subr.bf16.mxu0 0
        %472 = vmatpush1.bf16.xpose.msra.mxu0 0
        %473 = vmatprep.subr.bf16.mxu0 0
        %474 = vmatpush1.bf16.xpose.msra.mxu0 0
        %475 = vmatprep.subr.bf16.mxu0 0
        %476 = vmatpush1.bf16.xpose.msra.mxu0 0
        %477 = vmatprep.subr.bf16.mxu0 0
        %478 = vmatpush1.bf16.xpose.msra.mxu0 0
        %479 = vmatprep.subr.bf16.mxu0 0
        %480 = vmatpush1.bf16.xpose.msra.mxu0 0
        %481 = vmatprep.mubr.bf16.mxu0 0
        %482 = vmatmul.mubr.bf16.gmra.mrb[0].mxu0 %v444
        %v483 = vpop.f32.mrb[0].mxu0
        %v484 = vadd.f32 0.0, %v483
        %v485 = vpop.f32.mrb[0].mxu0
        %v486 = vpop.f32.mrb[0].mxu0
        %v487 = vpop.f32.mrb[0].mxu0
        %488 = vdwg.mxu0
        %v490 = vsel %vm396, %v386, 0
        %v493 = vsel %vm396, %v390, 0
        %495 = vmatprep.subr.bf16.mxu0 0
        %496 = vmatpush1.bf16.xpose.msra.mxu0 %v493
        %497 = vmatprep.subr.bf16.mxu0 0
        %498 = vmatpush1.bf16.xpose.msra.mxu0 0
        %499 = vmatprep.subr.bf16.mxu0 0
        %500 = vmatpush1.bf16.xpose.msra.mxu0 0
        %501 = vmatprep.subr.bf16.mxu0 0
        %502 = vmatpush1.bf16.xpose.msra.mxu0 0
        %503 = vmatprep.subr.bf16.mxu0 0
        %504 = vmatpush1.bf16.xpose.msra.mxu0 0
        %505 = vmatprep.subr.bf16.mxu0 0
        %506 = vmatpush1.bf16.xpose.msra.mxu0 0
        %507 = vmatprep.subr.bf16.mxu0 0
        %508 = vmatpush1.bf16.xpose.msra.mxu0 0
        %509 = vmatprep.subr.bf16.mxu0 0
        %510 = vmatpush1.bf16.xpose.msra.mxu0 0
        %511 = vmatprep.subr.bf16.mxu0 0
        %512 = vmatpush1.bf16.xpose.msra.mxu0 0
        %513 = vmatprep.subr.bf16.mxu0 0
        %514 = vmatpush1.bf16.xpose.msra.mxu0 0
        %515 = vmatprep.subr.bf16.mxu0 0
        %516 = vmatpush1.bf16.xpose.msra.mxu0 0
        %517 = vmatprep.subr.bf16.mxu0 0
        %518 = vmatpush1.bf16.xpose.msra.mxu0 0
        %519 = vmatprep.subr.bf16.mxu0 0
        %520 = vmatpush1.bf16.xpose.msra.mxu0 0
        %521 = vmatprep.subr.bf16.mxu0 0
        %522 = vmatpush1.bf16.xpose.msra.mxu0 0
        %523 = vmatprep.subr.bf16.mxu0 0
        %524 = vmatpush1.bf16.xpose.msra.mxu0 0
        %525 = vmatprep.subr.bf16.mxu0 0
        %526 = vmatpush1.bf16.xpose.msra.mxu0 0
        %527 = vmatprep.mubr.bf16.mxu0 0
        %528 = vmatmul.mubr.bf16.gmra.mrb[0].mxu0 %v490
        %v529 = vpop.f32.mrb[0].mxu0
        %v530 = vadd.f32 0.0, %v529
        %v531 = vpop.f32.mrb[0].mxu0
        %v532 = vpop.f32.mrb[0].mxu0
        %v533 = vpop.f32.mrb[0].mxu0
        %534 = vdwg.mxu0
        %v536 = vsel %vm396, %v387, 0
        %v539 = vsel %vm396, %v391, 0
        %541 = vmatprep.subr.bf16.mxu0 0
        %542 = vmatpush1.bf16.xpose.msra.mxu0 %v539
        %543 = vmatprep.subr.bf16.mxu0 0
        %544 = vmatpush1.bf16.xpose.msra.mxu0 0
        %545 = vmatprep.subr.bf16.mxu0 0
        %546 = vmatpush1.bf16.xpose.msra.mxu0 0
        %547 = vmatprep.subr.bf16.mxu0 0
        %548 = vmatpush1.bf16.xpose.msra.mxu0 0
        %549 = vmatprep.subr.bf16.mxu0 0
        %550 = vmatpush1.bf16.xpose.msra.mxu0 0
        %551 = vmatprep.subr.bf16.mxu0 0
        %552 = vmatpush1.bf16.xpose.msra.mxu0 0
        %553 = vmatprep.subr.bf16.mxu0 0
        %554 = vmatpush1.bf16.xpose.msra.mxu0 0
        %555 = vmatprep.subr.bf16.mxu0 0
        %556 = vmatpush1.bf16.xpose.msra.mxu0 0
        %557 = vmatprep.subr.bf16.mxu0 0
        %558 = vmatpush1.bf16.xpose.msra.mxu0 0
        %559 = vmatprep.subr.bf16.mxu0 0
        %560 = vmatpush1.bf16.xpose.msra.mxu0 0
        %561 = vmatprep.subr.bf16.mxu0 0
        %562 = vmatpush1.bf16.xpose.msra.mxu0 0
        %563 = vmatprep.subr.bf16.mxu0 0
        %564 = vmatpush1.bf16.xpose.msra.mxu0 0
        %565 = vmatprep.subr.bf16.mxu0 0
        %566 = vmatpush1.bf16.xpose.msra.mxu0 0
        %567 = vmatprep.subr.bf16.mxu0 0
        %568 = vmatpush1.bf16.xpose.msra.mxu0 0
        %569 = vmatprep.subr.bf16.mxu0 0
        %570 = vmatpush1.bf16.xpose.msra.mxu0 0
        %571 = vmatprep.subr.bf16.mxu0 0
        %572 = vmatpush1.bf16.xpose.msra.mxu0 0
        %573 = vmatprep.mubr.bf16.mxu0 0
        %574 = vmatmul.mubr.bf16.gmra.mrb[0].mxu0 %v536
        %v575 = vpop.f32.mrb[0].mxu0
        %v576 = vadd.f32 0.0, %v575
        %v577 = vpop.f32.mrb[0].mxu0
        %v578 = vpop.f32.mrb[0].mxu0
        %v579 = vpop.f32.mrb[0].mxu0
        %580 = vdwg.mxu0
        %v581 = vld [vmem:[#allocation2] sm:$0xff]
        %v582 = vld [vmem:[#allocation2 + $0x8] sm:$0xff]
        %v583 = vld [vmem:[#allocation2 + $0x10] sm:$0xff]
        %v584 = vld [vmem:[#allocation2 + $0x18] sm:$0xff]
        %v585 = vsel %vm396, %v438, -inf
        %586 = vmax.xlane.f32.xlu0 %v585
        %v587 = vpop.xlane.xlu0 %586
        %v588 = vsel %vm396, %v484, -inf
        %589 = vmax.xlane.f32.xlu0 %v588
        %v590 = vpop.xlane.xlu0 %589
        %v591 = vsel %vm396, %v530, -inf
        %592 = vmax.xlane.f32.xlu0 %v591
        %v593 = vpop.xlane.xlu0 %592
        %v594 = vsel %vm396, %v576, -inf
        %595 = vmax.xlane.f32.xlu0 %v594
        %v596 = vpop.xlane.xlu0 %595
        %v597 = vmax.f32 %v581, %v587
        %v598 = vmax.f32 %v582, %v590
        %v599 = vmax.f32 %v583, %v593
        %v600 = vmax.f32 %v584, %v596
        %v601 = vsub.f32 %v581, %v597
        %v602 = vsub.f32 %v582, %v598
        %v603 = vsub.f32 %v583, %v599
        %v604 = vsub.f32 %v584, %v600
        %v605 = vmul.f32 %v601, 1.442695
        %v606 = vpow.pop %v605
        %v607 = vmul.f32 %v602, 1.442695
        %v608 = vpow.pop %v607
        %v609 = vmul.f32 %v603, 1.442695
        %v610 = vpow.pop %v609
        %v611 = vmul.f32 %v604, 1.442695
        %v612 = vpow.pop %v611
        %614 = vset.pattern.permute.xlu0 0
        %615 = vperm.xlu0 %614, %v597
        %v616 = vpop.permute.xlu0 %615
        %619 = vset.pattern.permute.xlu0 0
        %620 = vperm.xlu0 %619, %v598
        %v621 = vpop.permute.xlu0 %620
        %624 = vset.pattern.permute.xlu0 0
        %625 = vperm.xlu0 %624, %v599
        %v626 = vpop.permute.xlu0 %625
        %629 = vset.pattern.permute.xlu0 0
        %630 = vperm.xlu0 %629, %v600
        %v631 = vpop.permute.xlu0 %630
        %v633 = vsub.f32 %v438, %v616
        %v634 = vsub.f32 %v484, %v621
        %v635 = vsub.f32 %v530, %v626
        %v636 = vsub.f32 %v576, %v631
        %v637 = vmul.f32 %v633, 1.442695
        %v638 = vpow.pop %v637
        %v639 = vmul.f32 %v634, 1.442695
        %v640 = vpow.pop %v639
        %v641 = vmul.f32 %v635, 1.442695
        %v642 = vpow.pop %v641
        %v643 = vmul.f32 %v636, 1.442695
        %v644 = vpow.pop %v643
        %v645 = vld [vmem:[#allocation3] sm:$0xff]
        %v646 = vld [vmem:[#allocation3 + $0x8] sm:$0xff]
        %v647 = vld [vmem:[#allocation3 + $0x10] sm:$0xff]
        %v648 = vld [vmem:[#allocation3 + $0x18] sm:$0xff]
        %v649 = vmul.f32 %v606, %v645
        %v650 = vmul.f32 %v608, %v646
        %v651 = vmul.f32 %v610, %v647
        %v652 = vmul.f32 %v612, %v648
        %v653 = vsel %vm396, %v638, 0.0
        %654 = vadd.xlane.f32.xlu0 %v653
        %v655 = vpop.xlane.xlu0 %654
        %v656 = vsel %vm396, %v640, 0.0
        %657 = vadd.xlane.f32.xlu0 %v656
        %v658 = vpop.xlane.xlu0 %657
        %v659 = vsel %vm396, %v642, 0.0
        %660 = vadd.xlane.f32.xlu0 %v659
        %v661 = vpop.xlane.xlu0 %660
        %v662 = vsel %vm396, %v644, 0.0
        %663 = vadd.xlane.f32.xlu0 %v662
        %v664 = vpop.xlane.xlu0 %663
        %v665 = vadd.f32 %v649, %v655
        %v666 = vadd.f32 %v650, %v658
        %v667 = vadd.f32 %v651, %v661
        %v668 = vadd.f32 %v652, %v664
        %vm669 = vcmask 7168
        %670 = vst.msk [vmem:[#allocation3] sm:$0xff] %vm669, %v665
        %671 = vst.msk [vmem:[#allocation3 + $0x8] sm:$0xff] %vm669, %v666
        %672 = vst.msk [vmem:[#allocation3 + $0x10] sm:$0xff] %vm669, %v667
        %673 = vst.msk [vmem:[#allocation3 + $0x18] sm:$0xff] %vm669, %v668
        %v674 = vpack.c.bf16 %v638, %v638
        %v675 = vpack.c.bf16 %v640, %v640
        %v676 = vpack.c.bf16 %v642, %v642
        %v677 = vpack.c.bf16 %v644, %v644
        %v679 = vsel %vm396, %v674, 0
        %vm681 = vcmask 1043456
        %v683 = vsel %vm681, %v392, 0
        %685 = vmatprep.subr.bf16.mxu0 0
        %686 = vmatpush1.bf16.msra.mxu0 %v683
        %687 = vmatprep.subr.bf16.mxu0 0
        %688 = vmatpush1.bf16.msra.mxu0 0
        %689 = vmatprep.subr.bf16.mxu0 0
        %690 = vmatpush1.bf16.msra.mxu0 0
        %691 = vmatprep.subr.bf16.mxu0 0
        %692 = vmatpush1.bf16.msra.mxu0 0
        %693 = vmatprep.subr.bf16.mxu0 0
        %694 = vmatpush1.bf16.msra.mxu0 0
        %695 = vmatprep.subr.bf16.mxu0 0
        %696 = vmatpush1.bf16.msra.mxu0 0
        %697 = vmatprep.subr.bf16.mxu0 0
        %698 = vmatpush1.bf16.msra.mxu0 0
        %699 = vmatprep.subr.bf16.mxu0 0
        %700 = vmatpush1.bf16.msra.mxu0 0
        %701 = vmatprep.subr.bf16.mxu0 0
        %702 = vmatpush1.bf16.msra.mxu0 0
        %703 = vmatprep.subr.bf16.mxu0 0
        %704 = vmatpush1.bf16.msra.mxu0 0
        %705 = vmatprep.subr.bf16.mxu0 0
        %706 = vmatpush1.bf16.msra.mxu0 0
        %707 = vmatprep.subr.bf16.mxu0 0
        %708 = vmatpush1.bf16.msra.mxu0 0
        %709 = vmatprep.subr.bf16.mxu0 0
        %710 = vmatpush1.bf16.msra.mxu0 0
        %711 = vmatprep.subr.bf16.mxu0 0
        %712 = vmatpush1.bf16.msra.mxu0 0
        %713 = vmatprep.subr.bf16.mxu0 0
        %714 = vmatpush1.bf16.msra.mxu0 0
        %715 = vmatprep.subr.bf16.mxu0 0
        %716 = vmatpush1.bf16.msra.mxu0 0
        %717 = vmatprep.mubr.bf16.mxu0 0
        %718 = vmatmul.mubr.bf16.gmra.mrb[0].mxu0 %v679
        %v719 = vpop.f32.mrb[0].mxu0
        %v720 = vadd.f32 0.0, %v719
        %v721 = vpop.f32.mrb[0].mxu0
        %v722 = vpop.f32.mrb[0].mxu0
        %v723 = vpop.f32.mrb[0].mxu0
        %724 = vdwg.mxu0
        %v726 = vsel %vm396, %v675, 0
        %v729 = vsel %vm681, %v393, 0
        %731 = vmatprep.subr.bf16.mxu0 0
        %732 = vmatpush1.bf16.msra.mxu0 %v729
        %733 = vmatprep.subr.bf16.mxu0 0
        %734 = vmatpush1.bf16.msra.mxu0 0
        %735 = vmatprep.subr.bf16.mxu0 0
        %736 = vmatpush1.bf16.msra.mxu0 0
        %737 = vmatprep.subr.bf16.mxu0 0
        %738 = vmatpush1.bf16.msra.mxu0 0
        %739 = vmatprep.subr.bf16.mxu0 0
        %740 = vmatpush1.bf16.msra.mxu0 0
        %741 = vmatprep.subr.bf16.mxu0 0
        %742 = vmatpush1.bf16.msra.mxu0 0
        %743 = vmatprep.subr.bf16.mxu0 0
        %744 = vmatpush1.bf16.msra.mxu0 0
        %745 = vmatprep.subr.bf16.mxu0 0
        %746 = vmatpush1.bf16.msra.mxu0 0
        %747 = vmatprep.subr.bf16.mxu0 0
        %748 = vmatpush1.bf16.msra.mxu0 0
        %749 = vmatprep.subr.bf16.mxu0 0
        %750 = vmatpush1.bf16.msra.mxu0 0
        %751 = vmatprep.subr.bf16.mxu0 0
        %752 = vmatpush1.bf16.msra.mxu0 0
        %753 = vmatprep.subr.bf16.mxu0 0
        %754 = vmatpush1.bf16.msra.mxu0 0
        %755 = vmatprep.subr.bf16.mxu0 0
        %756 = vmatpush1.bf16.msra.mxu0 0
        %757 = vmatprep.subr.bf16.mxu0 0
        %758 = vmatpush1.bf16.msra.mxu0 0
        %759 = vmatprep.subr.bf16.mxu0 0
        %760 = vmatpush1.bf16.msra.mxu0 0
        %761 = vmatprep.subr.bf16.mxu0 0
        %762 = vmatpush1.bf16.msra.mxu0 0
        %763 = vmatprep.mubr.bf16.mxu0 0
        %764 = vmatmul.mubr.bf16.gmra.mrb[0].mxu0 %v726
        %v765 = vpop.f32.mrb[0].mxu0
        %v766 = vadd.f32 0.0, %v765
        %v767 = vpop.f32.mrb[0].mxu0
        %v768 = vpop.f32.mrb[0].mxu0
        %v769 = vpop.f32.mrb[0].mxu0
        %770 = vdwg.mxu0
        %v772 = vsel %vm396, %v676, 0
        %v775 = vsel %vm681, %v394, 0
        %777 = vmatprep.subr.bf16.mxu0 0
        %778 = vmatpush1.bf16.msra.mxu0 %v775
        %779 = vmatprep.subr.bf16.mxu0 0
        %780 = vmatpush1.bf16.msra.mxu0 0
        %781 = vmatprep.subr.bf16.mxu0 0
        %782 = vmatpush1.bf16.msra.mxu0 0
        %783 = vmatprep.subr.bf16.mxu0 0
        %784 = vmatpush1.bf16.msra.mxu0 0
        %785 = vmatprep.subr.bf16.mxu0 0
        %786 = vmatpush1.bf16.msra.mxu0 0
        %787 = vmatprep.subr.bf16.mxu0 0
        %788 = vmatpush1.bf16.msra.mxu0 0
        %789 = vmatprep.subr.bf16.mxu0 0
        %790 = vmatpush1.bf16.msra.mxu0 0
        %791 = vmatprep.subr.bf16.mxu0 0
        %792 = vmatpush1.bf16.msra.mxu0 0
        %793 = vmatprep.subr.bf16.mxu0 0
        %794 = vmatpush1.bf16.msra.mxu0 0
        %795 = vmatprep.subr.bf16.mxu0 0
        %796 = vmatpush1.bf16.msra.mxu0 0
        %797 = vmatprep.subr.bf16.mxu0 0
        %798 = vmatpush1.bf16.msra.mxu0 0
        %799 = vmatprep.subr.bf16.mxu0 0
        %800 = vmatpush1.bf16.msra.mxu0 0
        %801 = vmatprep.subr.bf16.mxu0 0
        %802 = vmatpush1.bf16.msra.mxu0 0
        %803 = vmatprep.subr.bf16.mxu0 0
        %804 = vmatpush1.bf16.msra.mxu0 0
        %805 = vmatprep.subr.bf16.mxu0 0
        %806 = vmatpush1.bf16.msra.mxu0 0
        %807 = vmatprep.subr.bf16.mxu0 0
        %808 = vmatpush1.bf16.msra.mxu0 0
        %809 = vmatprep.mubr.bf16.mxu0 0
        %810 = vmatmul.mubr.bf16.gmra.mrb[0].mxu0 %v772
        %v811 = vpop.f32.mrb[0].mxu0
        %v812 = vadd.f32 0.0, %v811
        %v813 = vpop.f32.mrb[0].mxu0
        %v814 = vpop.f32.mrb[0].mxu0
        %v815 = vpop.f32.mrb[0].mxu0
        %816 = vdwg.mxu0
        %v818 = vsel %vm396, %v677, 0
        %v821 = vsel %vm681, %v395, 0
        %823 = vmatprep.subr.bf16.mxu0 0
        %824 = vmatpush1.bf16.msra.mxu0 %v821
        %825 = vmatprep.subr.bf16.mxu0 0
        %826 = vmatpush1.bf16.msra.mxu0 0
        %827 = vmatprep.subr.bf16.mxu0 0
        %828 = vmatpush1.bf16.msra.mxu0 0
        %829 = vmatprep.subr.bf16.mxu0 0
        %830 = vmatpush1.bf16.msra.mxu0 0
        %831 = vmatprep.subr.bf16.mxu0 0
        %832 = vmatpush1.bf16.msra.mxu0 0
        %833 = vmatprep.subr.bf16.mxu0 0
        %834 = vmatpush1.bf16.msra.mxu0 0
        %835 = vmatprep.subr.bf16.mxu0 0
        %836 = vmatpush1.bf16.msra.mxu0 0
        %837 = vmatprep.subr.bf16.mxu0 0
        %838 = vmatpush1.bf16.msra.mxu0 0
        %839 = vmatprep.subr.bf16.mxu0 0
        %840 = vmatpush1.bf16.msra.mxu0 0
        %841 = vmatprep.subr.bf16.mxu0 0
        %842 = vmatpush1.bf16.msra.mxu0 0
        %843 = vmatprep.subr.bf16.mxu0 0
        %844 = vmatpush1.bf16.msra.mxu0 0
        %845 = vmatprep.subr.bf16.mxu0 0
        %846 = vmatpush1.bf16.msra.mxu0 0
        %847 = vmatprep.subr.bf16.mxu0 0
        %848 = vmatpush1.bf16.msra.mxu0 0
        %849 = vmatprep.subr.bf16.mxu0 0
        %850 = vmatpush1.bf16.msra.mxu0 0
        %851 = vmatprep.subr.bf16.mxu0 0
        %852 = vmatpush1.bf16.msra.mxu0 0
        %853 = vmatprep.subr.bf16.mxu0 0
        %854 = vmatpush1.bf16.msra.mxu0 0
        %855 = vmatprep.mubr.bf16.mxu0 0
        %856 = vmatmul.mubr.bf16.gmra.mrb[0].mxu0 %v818
        %v857 = vpop.f32.mrb[0].mxu0
        %v858 = vadd.f32 0.0, %v857
        %v859 = vpop.f32.mrb[0].mxu0
        %v860 = vpop.f32.mrb[0].mxu0
        %v861 = vpop.f32.mrb[0].mxu0
        %862 = vdwg.mxu0
        %v863 = vld [vmem:[#allocation4] sm:$0xff]
        %v864 = vld [vmem:[#allocation4 + $0x8] sm:$0xff]
        %v865 = vld [vmem:[#allocation4 + $0x10] sm:$0xff]
        %v866 = vld [vmem:[#allocation4 + $0x18] sm:$0xff]
        %868 = vset.pattern.permute.xlu0 0
        %869 = vperm.xlu0 %868, %v606
        %v870 = vpop.permute.xlu0 %869
        %873 = vset.pattern.permute.xlu0 0
        %874 = vperm.xlu0 %873, %v608
        %v875 = vpop.permute.xlu0 %874
        %878 = vset.pattern.permute.xlu0 0
        %879 = vperm.xlu0 %878, %v610
        %v880 = vpop.permute.xlu0 %879
        %883 = vset.pattern.permute.xlu0 0
        %884 = vperm.xlu0 %883, %v612
        %v885 = vpop.permute.xlu0 %884
        %v887 = vmul.f32 %v870, %v863
        %v888 = vmul.f32 %v875, %v864
        %v889 = vmul.f32 %v880, %v865
        %v890 = vmul.f32 %v885, %v866
        %v891 = vadd.f32 %v887, %v720
        %v892 = vadd.f32 %v888, %v766
        %v893 = vadd.f32 %v889, %v812
        %v894 = vadd.f32 %v890, %v858
        %895 = vst.msk [vmem:[#allocation4] sm:$0xff] %vm396, %v891
        %896 = vst.msk [vmem:[#allocation4 + $0x8] sm:$0xff] %vm396, %v892
        %897 = vst.msk [vmem:[#allocation4 + $0x10] sm:$0xff] %vm396, %v893
        %898 = vst.msk [vmem:[#allocation4 + $0x18] sm:$0xff] %vm396, %v894
        %899 = vst.msk [vmem:[#allocation2] sm:$0xff] %vm669, %v597
        %900 = vst.msk [vmem:[#allocation2 + $0x8] sm:$0xff] %vm669, %v598
        %901 = vst.msk [vmem:[#allocation2 + $0x10] sm:$0xff] %vm669, %v599
        %902 = vst.msk [vmem:[#allocation2 + $0x18] sm:$0xff] %vm669, %v600
        // Predicated region
        $region61: #{tpu_custom_call.1} parent=39 // pred_check
          %p903 = pneg %p366
        $region62: #{tpu_custom_call.1} parent=39 // pred_check_branch
          %905 = sbr.rel (%p903) target = $region64
        $region63: #{tpu_custom_call.1} parent=39 // pred_region
          %v906 = vld [vmem:[#allocation3] sm:$0xff]
          %v907 = vrcp.pop %v906
          %v908 = vld [vmem:[#allocation4] sm:$0xff]
          %910 = vset.pattern.permute.xlu0 0
          %911 = vperm.xlu0 %910, %v907
          %v912 = vpop.permute.xlu0 %911
          %v914 = vmul.f32 %v908, %v912
          %v915 = vpack.c.bf16 %v914, %v914
          %vm916 = vcmask 60416
          %917 = vst.msk [vmem:[#allocation5] sm:$0xf] %vm916, %v915
          %s918 = scalar_lea.vmem [#allocation3], 8
          %v919 = vld [vmem:[%s918] sm:$0xff]
          %v920 = vrcp.pop %v919
          %s921 = scalar_lea.vmem [#allocation4], 8
          %v922 = vld [vmem:[%s921] sm:$0xff]
          %924 = vset.pattern.permute.xlu0 0
          %925 = vperm.xlu0 %924, %v920
          %v926 = vpop.permute.xlu0 %925
          %v928 = vmul.f32 %v922, %v926
          %v929 = vpack.c.bf16 %v928, %v928
          %v931 = vunpack.c.l.b16 %v929
          %v932 = vpack.c.b16 %v931, %v931
          %933 = vrot.lane.b32.xlu0 %v932, 8
          %v934 = vpop.permute.xlu0 %933
          %vm936 = vcmask 126016
          %937 = vst.msk [vmem:[#allocation5] sm:$0xf] %vm936, %v934
          %s938 = scalar_lea.vmem [#allocation3], 16
          %v939 = vld [vmem:[%s938] sm:$0xff]
          %v940 = vrcp.pop %v939
          %s941 = scalar_lea.vmem [#allocation4], 16
          %v942 = vld [vmem:[%s941] sm:$0xff]
          %944 = vset.pattern.permute.xlu0 0
          %945 = vperm.xlu0 %944, %v940
          %v946 = vpop.permute.xlu0 %945
          %v948 = vmul.f32 %v942, %v946
          %v949 = vpack.c.bf16 %v948, %v948
          %v951 = vunpack.c.l.b16 %v949
          %v952 = vpack.c.b16 %v951, %v951
          %953 = vrot.lane.b32.xlu0 %v952, 16
          %v954 = vpop.permute.xlu0 %953
          %vm956 = vcmask 191616
          %957 = vst.msk [vmem:[#allocation5] sm:$0xf] %vm956, %v954
          %s958 = scalar_lea.vmem [#allocation3], 24
          %v959 = vld [vmem:[%s958] sm:$0xff]
          %v960 = vrcp.pop %v959
          %s961 = scalar_lea.vmem [#allocation4], 24
          %v962 = vld [vmem:[%s961] sm:$0xff]
          %964 = vset.pattern.permute.xlu0 0
          %965 = vperm.xlu0 %964, %v960
          %v966 = vpop.permute.xlu0 %965
          %v968 = vmul.f32 %v962, %v966
          %v969 = vpack.c.bf16 %v968, %v968
          %v971 = vunpack.c.l.b16 %v969
          %v972 = vpack.c.b16 %v971, %v971
          %973 = vrot.lane.b32.xlu0 %v972, 24
          %v974 = vpop.permute.xlu0 %973
          %vm976 = vcmask 257216
          %977 = vst.msk [vmem:[#allocation5] sm:$0xf] %vm976, %v974
          %v978 = vld [vmem:[#allocation5] sm:$0xf]
          %v979 = vld [vmem:[#allocation12] sm:$0xf]
          %v980 = vld [vmem:[#allocation12 + $0x4] sm:$0xf]
          %v981 = vld [vmem:[#allocation12 + $0x8] sm:$0xf]
          %v982 = vld [vmem:[#allocation12 + $0xc] sm:$0xf]
          %v983 = vld [vmem:[%s4] sm:$0x1]
          %v985 = vlaneseq
          %v986 = vshrl.u32 %v985, 7
          %v987 = vsub.s32 0, %v986
          %v988 = vrot.slane %v983, %v987
          %v994 = vunpack.c.l.b16 %v979
          %v995 = vunpack.c.l.b16 %v980
          %v996 = vunpack.c.l.b16 %v981
          %v997 = vunpack.c.l.b16 %v982
          %v998 = vpack.c.b16 %v995, %v994
          %v999 = vpack.c.b16 %v997, %v996
          %vm1002 = vcmask 261120
          %v1004 = vsel %vm1002, %v978, 0
          %1006 = vmatprep.subr.bf16.mxu0 0
          %1007 = vmatpush1.bf16.msra.mxu0 %v998
          %1008 = vmatprep.subr.bf16.mxu0 0
          %1009 = vmatpush1.bf16.msra.mxu0 %v999
          %1010 = vmatprep.subr.bf16.mxu0 0
          %1011 = vmatpush1.bf16.msra.mxu0 0
          %1012 = vmatprep.subr.bf16.mxu0 0
          %1013 = vmatpush1.bf16.msra.mxu0 0
          %1014 = vmatprep.subr.bf16.mxu0 0
          %1015 = vmatpush1.bf16.msra.mxu0 0
          %1016 = vmatprep.subr.bf16.mxu0 0
          %1017 = vmatpush1.bf16.msra.mxu0 0
          %1018 = vmatprep.subr.bf16.mxu0 0
          %1019 = vmatpush1.bf16.msra.mxu0 0
          %1020 = vmatprep.subr.bf16.mxu0 0
          %1021 = vmatpush1.bf16.msra.mxu0 0
          %1022 = vmatprep.subr.bf16.mxu0 0
          %1023 = vmatpush1.bf16.msra.mxu0 0
          %1024 = vmatprep.subr.bf16.mxu0 0
          %1025 = vmatpush1.bf16.msra.mxu0 0
          %1026 = vmatprep.subr.bf16.mxu0 0
          %1027 = vmatpush1.bf16.msra.mxu0 0
          %1028 = vmatprep.subr.bf16.mxu0 0
          %1029 = vmatpush1.bf16.msra.mxu0 0
          %1030 = vmatprep.subr.bf16.mxu0 0
          %1031 = vmatpush1.bf16.msra.mxu0 0
          %1032 = vmatprep.subr.bf16.mxu0 0
          %1033 = vmatpush1.bf16.msra.mxu0 0
          %1034 = vmatprep.subr.bf16.mxu0 0
          %1035 = vmatpush1.bf16.msra.mxu0 0
          %1036 = vmatprep.subr.bf16.mxu0 0
          %1037 = vmatpush1.bf16.msra.mxu0 0
          %1038 = vmatprep.mubr.bf16.mxu0 0
          %1039 = vmatmul.mubr.bf16.gmra.mrb[0].mxu0 %v1004
          %v1040 = vpop.f32.mrb[0].mxu0
          %v1041 = vadd.f32 %v988, %v1040
          %v1042 = vpop.f32.mrb[0].mxu0
          %v1043 = vpop.f32.mrb[0].mxu0
          %v1044 = vpop.f32.mrb[0].mxu0
          %1045 = vdwg.mxu0
          %v1046 = vpack.c.bf16 %v1041, %v1041
          %vm1047 = vcmask 257024
          %1048 = vst.msk [vmem:[%s364] sm:$0xf] %vm1047, %v1046
        $region64: #{tpu_custom_call.1} parent=39 // pred_fallthru
          _
        %s1049 = sand.u32 %s181, 1
        %s1050 = scalar_lea.sflag [#allocation8], %s1049
        %s1051 = sand.u32 %s181, 1
        %s1052 = smul.addr %s1051, 4
        %s1053 = scalar_lea.vmem [#allocation14], %s1052
        // Predicated region
        $region65: #{tpu_custom_call.1} parent=39 // pred_check
          %p1054 = pneg %p191
        $region66: #{tpu_custom_call.1} parent=39 // pred_check_branch
          %1056 = sbr.rel (%p1054) target = $region68
        $region67: #{tpu_custom_call.1} parent=39 // pred_region
          %s1058 = ssub.s32 64, 64
          %1059 = vsyncadd %s1050, %s1058
          %s1060 = sadd.s32 %s32, %s31
          %s1061 = smul.addr %s1060, 64
          %s1062 = scalar_lea.hbm %s5, %s1061
          %s1064 = sshll.u32 %s1053, 4
          %s1065 = int_to_ptr.vmem [resolvable:$true] %s1064
          %1067 = dma.vmem_to_hbm [thread:$0]  %s1065, 64, %s1062, %s1050
        $region68: #{tpu_custom_call.1} parent=39 // pred_fallthru
          _
      $region40: #{tpu_custom_call.1} parent=5 // pred_fallthru
        _
      %p1068 = scmp.le.s32.totalorder 2, %s21
      // Predicated region
      $region69: #{tpu_custom_call.1} parent=5 // pred_check
        %p1069 = pneg %p1068
      $region70: #{tpu_custom_call.1} parent=5 // pred_check_branch
        %1071 = sbr.rel (%p1069) target = $region72
      $region71: #{tpu_custom_call.1} parent=5 // pred_region
        %s1072 = ssub.s32 %s21, 2
        // Predicated region
        $region73: #{tpu_custom_call.1} parent=71 // pred_check
          %p1073 = pneg %p197
        $region74: #{tpu_custom_call.1} parent=71 // pred_check_branch
          %1075 = sbr.rel (%p1073) target = $region76
        $region75: #{tpu_custom_call.1} parent=71 // pred_region
          %s1076 = sand.u32 %s182, 1
          %s1077 = scalar_lea.sflag [#allocation8], %s1076
          %s1078 = sand.u32 %s182, 1
          %s1079 = smul.addr %s1078, 4
          %s1080 = scalar_lea.vmem [#allocation14], %s1079
          %1081 = dma.done %s1077, 64
        $region76: #{tpu_custom_call.1} parent=71 // pred_fallthru
          _
      $region72: #{tpu_custom_call.1} parent=5 // pred_fallthru
        _
    $region6: #{tpu_custom_call.1} parent=1 // loop_footer
      %s25 = sadd.s32 1, %s21
    $region7: #{tpu_custom_call.1} parent=1 // loop_footer_branch
      %20 = sbr.rel target = $region3
    $region8: #{tpu_custom_call.1} parent=1 // loop_exit
      _
    %1082 = vsyncpa [#allocation7], 1
    %s1083 = scalar_lea.sflag [#allocation7], 1
    %1084 = vsyncpa %s1083, 1
    %1085 = vsyncpa [#allocation10], 1
    %s1086 = scalar_lea.sflag [#allocation10], 1
    %1087 = vsyncpa %s1086, 1
    %1088 = vsyncpa [#allocation13], 1
    %1089 = vsyncpa [#allocation8], 1
    %s1090 = scalar_lea.sflag [#allocation8], 1
    %1091 = vsyncpa %s1090, 1

// kernel: tpu_custom_call.1
$region0: #{tpu_custom_call.1}
  #allocation0 [shape = 'u32[]', space=smem, size = 0x4, offset = 0x4, fixed_abs, tag = 'smem constant byte address 0x4 - core index']
  #allocation1 [shape = 'u32[144,128]{1,0:T(1,128)}', space=vmem, size = 0x12000, scoped, tag = 'internal scratch']
  #allocation2 [shape = 'f32[4,8,1]{2,1,0:T(8,128)}', space=vmem, size = 0x4000, scoped, tag = 'scratch operand']
  #allocation3 [shape = 'f32[4,8,1]{2,1,0:T(8,128)}', space=vmem, size = 0x4000, scoped, tag = 'scratch operand']
  #allocation4 [shape = 'f32[4,8,8]{2,1,0:T(8,128)}', space=vmem, size = 0x4000, scoped, tag = 'scratch operand']
  #allocation5 [shape = 'bf16[8,32]{1,0:T(8,128)(2,1)}', space=vmem, size = 0x800, scoped, tag = 'scratch operand']
  %s0 = inlined_call_operand.hbm [shape: bf16[2,4,8,8], index: 0, kind: input, shape index: {}]
  %s1 = inlined_call_operand.hbm [shape: bf16[2,4,8,8], index: 1, kind: input, shape index: {}]
  %s2 = inlined_call_operand.hbm [shape: bf16[2,4,8,8], index: 2, kind: input, shape index: {}]
  %s3 = inlined_call_operand.hbm [shape: bf16[32,32], index: 3, kind: input, shape index: {}]
  %s4 = inlined_call_operand.vmem [shape: f32[1,32], index: 4, kind: input, shape index: {}]
  %s5 = inlined_call_operand.hbm [shape: bf16[2,8,32], index: 5, kind: output, shape index: {}]
  %s6 = sld [smem:[#allocation0]]
  $region77: #{tpu_custom_call.1} parent=0
    _
  %s8 = ssub.s32 1, %s6
  %s9 = scalar_select 0, %s8, %s6
  $region1: #{tpu_custom_call.1} parent=0
    #allocation6 [shape = 'u8[16384]{0}', space=vmem, size = 0x4000, scoped, tag = 'input window, operand 0']
    #allocation7 [shape = 's32[2]{0}', space=sflag, size = 0x8, scoped, tag = 'scoped memory for tpu_custom_call.1']
    #allocation8 [shape = 's32[2]{0}', space=sflag, size = 0x8, scoped, tag = 'scoped memory for tpu_custom_call.1']
    #allocation9 [shape = 'u8[16384]{0}', space=vmem, size = 0x4000, scoped, tag = 'input window, operand 1']
    #allocation10 [shape = 's32[2]{0}', space=sflag, size = 0x8, scoped, tag = 'scoped memory for tpu_custom_call.1']
    #allocation11 [shape = 'u8[16384]{0}', space=vmem, size = 0x4000, scoped, tag = 'input window, operand 2']
    #allocation12 [shape = 'u8[8192]{0}', space=vmem, size = 0x2000, scoped, tag = 'input window, operand 3, single buffered']
    #allocation13 [shape = 's32[1]{0}', space=sflag, size = 0x4, scoped, tag = 'scoped memory for tpu_custom_call.1']
    #allocation14 [shape = 'u8[4096]{0}', space=vmem, size = 0x1000, scoped, tag = 'output window, operand 0']
    %10 = vsyncpa [#allocation7], 0
    %s11 = scalar_lea.sflag [#allocation7], 1
    %12 = vsyncpa %s11, 0
    %13 = vsyncpa [#allocation10], 0
    %s14 = scalar_lea.sflag [#allocation10], 1
    %15 = vsyncpa %s14, 0
    %16 = vsyncpa [#allocation13], 0
    %17 = vsyncpa [#allocation8], 0
    %s18 = scalar_lea.sflag [#allocation8], 1
    %19 = vsyncpa %s18, 0
    loop: start=0, step=1, limit=4
    $region2: #{tpu_custom_call.1} parent=1 // loop_pre_header
      _
    $region3: #{tpu_custom_call.1} parent=1 // loop_header
      %s21 = sphi 0, %s25
      %p22 = scmp.ge.s32.totalorder %s21, 4
      %s28 = sphi 0, %s47
      %s29 = sphi 0, %s43
      %s30 = sphi 0, %s39
      %s31 = sphi 0, %s28
      %s32 = sphi 0, %s29
      %s33 = sphi 0, %s30
      %s34 = sphi 0, %s31
      %s35 = sphi 0, %s32
      %s36 = sphi 0, %s33
      %s52 = sphi 0, %s54
      %s55 = sphi 0, %s52
      %s56 = sphi 0, %s55
      %s72 = sphi 0, %s56
      %s80 = sphi 0, %s82
      %s83 = sphi 0, %s80
      %s84 = sphi 0, %s83
      %s100 = sphi 0, %s84
      %s108 = sphi 0, %s110
      %s111 = sphi 0, %s108
      %s112 = sphi 0, %s111
      %s128 = sphi 0, %s112
      %s132 = sphi 0, %s132
      %s134 = sphi 0, %s132
      %s135 = sphi 0, %s134
      %s149 = sphi 0, %s135
      %s153 = sphi 0, %s153
      %s155 = sphi 0, %s153
      %s156 = sphi 0, %s155
      %s170 = sphi 0, %s156
      %s178 = sphi 0, %s180
      %s181 = sphi 0, %s178
      %s182 = sphi 0, %s181
      %s198 = sphi 0, %s182
    $region4: #{tpu_custom_call.1} parent=1 // loop_header_branch
      %24 = sbr.rel (%p22) target = $region8
    $region5: #{tpu_custom_call.1} parent=1 // loop_body
      %s26 = ssub.s32 %s21, 1
      %s27 = ssub.s32 %s21, 2
      %s37 = sadd.s32 1, %s30
      %p38 = scmp.ge.s32.totalorder %s37, 1
      %s39 = scalar_select %p38, 0, %s37
      %s40 = sadd.s32 1, %s29
      %s41 = scalar_select %p38, %s40, %s29
      %p42 = scmp.ge.s32.totalorder %s41, 1
      %s43 = scalar_select %p42, 0, %s41
      %s44 = sadd.s32 1, %s28
      %s45 = scalar_select %p42, %s44, %s28
      %p46 = scmp.ge.s32.totalorder %s45, 2
      %s47 = scalar_select %p46, 0, %s45
      %s48 = ssub.s32 %s28, %s47
      %s49 = ssub.s32 %s29, %s43
      %s50 = sor.u32 %s48, %s49
      %p51 = scmp.eq.s32.totalorder %s50, 0
      %s53 = sadd.s32 %s52, 1
      %s54 = scalar_select %p51, %s52, %s53
      %p57 = pneg %p51
      %p58 = scmp.eq.s32.totalorder %s21, 1
      %p59 = por %p57, %p58
      %p60 = scmp.ne.s32.totalorder %s52, %s55
      %p61 = scmp.eq.s32.totalorder %s21, 0
      %p62 = por %p60, %p61
      %p63 = scmp.ne.s32.totalorder %s52, %s55
      %p64 = scmp.eq.s32.totalorder %s26, 1
      %p65 = por %p63, %p64
      %p66 = scmp.ne.s32.totalorder %s55, %s56
      %p67 = scmp.eq.s32.totalorder %s26, 0
      %p68 = por %p66, %p67
      %p69 = scmp.ne.s32.totalorder %s55, %s56
      %p70 = scmp.eq.s32.totalorder %s27, 1
      %p71 = por %p69, %p70
      %p73 = scmp.ne.s32.totalorder %s56, %s72
      %p74 = scmp.eq.s32.totalorder %s27, 0
      %p75 = por %p73, %p74
      %s76 = ssub.s32 %s28, %s47
      %s77 = ssub.s32 %s30, %s39
      %s78 = sor.u32 %s76, %s77
      %p79 = scmp.eq.s32.totalorder %s78, 0
      %s81 = sadd.s32 %s80, 1
      %s82 = scalar_select %p79, %s80, %s81
      %p85 = pneg %p79
      %p86 = scmp.eq.s32.totalorder %s21, 1
      %p87 = por %p85, %p86
      %p88 = scmp.ne.s32.totalorder %s80, %s83
      %p89 = scmp.eq.s32.totalorder %s21, 0
      %p90 = por %p88, %p89
      %p91 = scmp.ne.s32.totalorder %s80, %s83
      %p92 = scmp.eq.s32.totalorder %s26, 1
      %p93 = por %p91, %p92
      %p94 = scmp.ne.s32.totalorder %s83, %s84
      %p95 = scmp.eq.s32.totalorder %s26, 0
      %p96 = por %p94, %p95
      %p97 = scmp.ne.s32.totalorder %s83, %s84
      %p98 = scmp.eq.s32.totalorder %s27, 1
      %p99 = por %p97, %p98
      %p101 = scmp.ne.s32.totalorder %s84, %s100
      %p102 = scmp.eq.s32.totalorder %s27, 0
      %p103 = por %p101, %p102
      %s104 = ssub.s32 %s28, %s47
      %s105 = ssub.s32 %s30, %s39
      %s106 = sor.u32 %s104, %s105
      %p107 = scmp.eq.s32.totalorder %s106, 0
      %s109 = sadd.s32 %s108, 1
      %s110 = scalar_select %p107, %s108, %s109
      %p113 = pneg %p107
      %p114 = scmp.eq.s32.totalorder %s21, 1
      %p115 = por %p113, %p114
      %p116 = scmp.ne.s32.totalorder %s108, %s111
      %p117 = scmp.eq.s32.totalorder %s21, 0
      %p118 = por %p116, %p117
      %p119 = scmp.ne.s32.totalorder %s108, %s111
      %p120 = scmp.eq.s32.totalorder %s26, 1
      %p121 = por %p119, %p120
      %p122 = scmp.ne.s32.totalorder %s111, %s112
      %p123 = scmp.eq.s32.totalorder %s26, 0
      %p124 = por %p122, %p123
      %p125 = scmp.ne.s32.totalorder %s111, %s112
      %p126 = scmp.eq.s32.totalorder %s27, 1
      %p127 = por %p125, %p126
      %p129 = scmp.ne.s32.totalorder %s112, %s128
      %p130 = scmp.eq.s32.totalorder %s27, 0
      %p131 = por %p129, %p130
      %s133 = sadd.s32 %s132, 1
      %p136 = scmp.eq.s32.totalorder %s21, 1
      %p137 = scmp.ne.s32.totalorder %s132, %s134
      %p138 = scmp.eq.s32.totalorder %s21, 0
      %p139 = por %p137, %p138
      %p140 = scmp.ne.s32.totalorder %s132, %s134
      %p141 = scmp.eq.s32.totalorder %s26, 1
      %p142 = por %p140, %p141
      %p143 = scmp.ne.s32.totalorder %s134, %s135
      %p144 = scmp.eq.s32.totalorder %s26, 0
      %p145 = por %p143, %p144
      %p146 = scmp.ne.s32.totalorder %s134, %s135
      %p147 = scmp.eq.s32.totalorder %s27, 1
      %p148 = por %p146, %p147
      %p150 = scmp.ne.s32.totalorder %s135, %s149
      %p151 = scmp.eq.s32.totalorder %s27, 0
      %p152 = por %p150, %p151
      %s154 = sadd.s32 %s153, 1
      %p157 = scmp.eq.s32.totalorder %s21, 1
      %p158 = scmp.ne.s32.totalorder %s153, %s155
      %p159 = scmp.eq.s32.totalorder %s21, 0
      %p160 = por %p158, %p159
      %p161 = scmp.ne.s32.totalorder %s153, %s155
      %p162 = scmp.eq.s32.totalorder %s26, 1
      %p163 = por %p161, %p162
      %p164 = scmp.ne.s32.totalorder %s155, %s156
      %p165 = scmp.eq.s32.totalorder %s26, 0
      %p166 = por %p164, %p165
      %p167 = scmp.ne.s32.totalorder %s155, %s156
      %p168 = scmp.eq.s32.totalorder %s27, 1
      %p169 = por %p167, %p168
      %p171 = scmp.ne.s32.totalorder %s156, %s170
      %p172 = scmp.eq.s32.totalorder %s27, 0
      %p173 = por %p171, %p172
      %s174 = ssub.s32 %s28, %s47
      %s175 = ssub.s32 %s29, %s43
      %s176 = sor.u32 %s174, %s175
      %p177 = scmp.eq.s32.totalorder %s176, 0
      %s179 = sadd.s32 %s178, 1
      %s180 = scalar_select %p177, %s178, %s179
      %p183 = pneg %p177
      %p184 = scmp.eq.s32.totalorder %s21, 1
      %p185 = por %p183, %p184
      %p186 = scmp.ne.s32.totalorder %s178, %s181
      %p187 = scmp.eq.s32.totalorder %s21, 0
      %p188 = por %p186, %p187
      %p189 = scmp.ne.s32.totalorder %s178, %s181
      %p190 = scmp.eq.s32.totalorder %s26, 1
      %p191 = por %p189, %p190
      %p192 = scmp.ne.s32.totalorder %s181, %s182
      %p193 = scmp.eq.s32.totalorder %s26, 0
      %p194 = por %p192, %p193
      %p195 = scmp.ne.s32.totalorder %s181, %s182
      %p196 = scmp.eq.s32.totalorder %s27, 1
      %p197 = por %p195, %p196
      %p199 = scmp.ne.s32.totalorder %s182, %s198
      %p200 = scmp.eq.s32.totalorder %s27, 0
      %p201 = por %p199, %p200
      %p202 = scmp.le.s32.totalorder 1, %s21
      %p203 = scmp.lt.s32.totalorder %s21, 3
      %p204 = pnand %p202, %p203
      %p205 = pneg %p204
      // Predicated region
      $region9: #{tpu_custom_call.1} parent=5 // pred_check
        _
      $region10: #{tpu_custom_call.1} parent=5 // pred_check_branch
        %207 = sbr.rel (%p204) target = $region12
      $region11: #{tpu_custom_call.1} parent=5 // pred_region
        %s208 = ssub.s32 %s21, 1
        // Predicated region
        $region13: #{tpu_custom_call.1} parent=11 // pred_check
          %p209 = pneg %p145
        $region14: #{tpu_custom_call.1} parent=11 // pred_check_branch
          %211 = sbr.rel (%p209) target = $region16
        $region15: #{tpu_custom_call.1} parent=11 // pred_region
          %s213 = ssub.s32 256, 256
          %214 = vsyncadd [#allocation13], %s213
          %s215 = sshll.u32 [#allocation12], 4
          %s216 = int_to_ptr.vmem [resolvable:$true] %s215
          %221 = dma.hbm_to_vmem [thread:$0]  %s3, 256, %s216, [#allocation13], 64, 64, 4
        $region16: #{tpu_custom_call.1} parent=11 // pred_fallthru
          _
        // Predicated region
        $region17: #{tpu_custom_call.1} parent=11 // pred_check
          %p222 = pneg %p166
        $region18: #{tpu_custom_call.1} parent=11 // pred_check_branch
          %224 = sbr.rel (%p222) target = $region20
        $region19: #{tpu_custom_call.1} parent=11 // pred_region
          _
        $region20: #{tpu_custom_call.1} parent=11 // pred_fallthru
          _
      $region12: #{tpu_custom_call.1} parent=5 // pred_fallthru
        _
      %p225 = scmp.lt.s32.totalorder %s21, 2
      // Predicated region
      $region21: #{tpu_custom_call.1} parent=5 // pred_check
        %p226 = pneg %p225
      $region22: #{tpu_custom_call.1} parent=5 // pred_check_branch
        %228 = sbr.rel (%p226) target = $region24
      $region23: #{tpu_custom_call.1} parent=5 // pred_region
        // Predicated region
        $region25: #{tpu_custom_call.1} parent=23 // pred_check
          %p229 = pneg %p62
        $region26: #{tpu_custom_call.1} parent=23 // pred_check_branch
          %231 = sbr.rel (%p229) target = $region28
        $region27: #{tpu_custom_call.1} parent=23 // pred_region
          %s232 = sand.u32 %s52, 1
          %s233 = scalar_lea.sflag [#allocation7], %s232
          %s234 = sand.u32 %s52, 1
          %s235 = smul.addr %s234, 16
          %s236 = scalar_lea.vmem [#allocation6], %s235
          %s238 = ssub.s32 256, 256
          %239 = vsyncadd %s233, %s238
          %s240 = smul.addr %s28, 4
          %s241 = sadd.s32 %s29, %s240
          %s242 = smul.addr %s241, 64
          %s243 = scalar_lea.hbm %s0, %s242
          %s244 = sshll.u32 %s236, 4
          %s245 = int_to_ptr.vmem [resolvable:$true] %s244
          %250 = dma.hbm_to_vmem [thread:$0]  %s243, 256, %s245, %s233, 64, 64, 4
        $region28: #{tpu_custom_call.1} parent=23 // pred_fallthru
          _
        // Predicated region
        $region29: #{tpu_custom_call.1} parent=23 // pred_check
          %p251 = pneg %p90
        $region30: #{tpu_custom_call.1} parent=23 // pred_check_branch
          %253 = sbr.rel (%p251) target = $region32
        $region31: #{tpu_custom_call.1} parent=23 // pred_region
          %s254 = sand.u32 %s21, 1
          %s255 = scalar_lea.sflag [#allocation10], %s254
          %s256 = sand.u32 %s80, 1
          %s257 = smul.addr %s256, 16
          %s258 = scalar_lea.vmem [#allocation9], %s257
          %s260 = ssub.s32 256, 256
          %261 = vsyncadd %s255, %s260
          %s262 = smul.addr %s28, 4
          %s263 = sadd.s32 %s30, %s262
          %s264 = smul.addr %s263, 64
          %s265 = scalar_lea.hbm %s1, %s264
          %s266 = sshll.u32 %s258, 4
          %s267 = int_to_ptr.vmem [resolvable:$true] %s266
          %272 = dma.hbm_to_vmem [thread:$0]  %s265, 256, %s267, %s255, 64, 64, 4
        $region32: #{tpu_custom_call.1} parent=23 // pred_fallthru
          _
        // Predicated region
        $region33: #{tpu_custom_call.1} parent=23 // pred_check
          %p273 = pneg %p118
        $region34: #{tpu_custom_call.1} parent=23 // pred_check_branch
          %275 = sbr.rel (%p273) target = $region36
        $region35: #{tpu_custom_call.1} parent=23 // pred_region
          %s276 = sand.u32 %s21, 1
          %s277 = scalar_lea.sflag [#allocation10], %s276
          %s278 = sand.u32 %s108, 1
          %s279 = smul.addr %s278, 16
          %s280 = scalar_lea.vmem [#allocation11], %s279
          %s282 = ssub.s32 256, 256
          %283 = vsyncadd %s277, %s282
          %s284 = smul.addr %s28, 4
          %s285 = sadd.s32 %s30, %s284
          %s286 = smul.addr %s285, 64
          %s287 = scalar_lea.hbm %s2, %s286
          %s288 = sshll.u32 %s280, 4
          %s289 = int_to_ptr.vmem [resolvable:$true] %s288
          %294 = dma.hbm_to_vmem [thread:$0]  %s287, 256, %s289, %s277, 64, 64, 4
        $region36: #{tpu_custom_call.1} parent=23 // pred_fallthru
          _
      $region24: #{tpu_custom_call.1} parent=5 // pred_fallthru
        _
      %p295 = scmp.le.s32.totalorder 1, %s21
      %p296 = scmp.lt.s32.totalorder %s21, 3
      %p297 = pnand %p295, %p296
      %p298 = pneg %p297
      // Predicated region
      $region37: #{tpu_custom_call.1} parent=5 // pred_check
        _
      $region38: #{tpu_custom_call.1} parent=5 // pred_check_branch
        %300 = sbr.rel (%p297) target = $region40
      $region39: #{tpu_custom_call.1} parent=5 // pred_region
        %s301 = ssub.s32 %s21, 1
        %s302 = sand.u32 %s55, 1
        %s303 = scalar_lea.sflag [#allocation7], %s302
        %s304 = sand.u32 %s55, 1
        %s305 = smul.addr %s304, 16
        %s306 = scalar_lea.vmem [#allocation6], %s305
        // Predicated region
        $region41: #{tpu_custom_call.1} parent=39 // pred_check
          %p307 = pneg %p68
        $region42: #{tpu_custom_call.1} parent=39 // pred_check_branch
          %309 = sbr.rel (%p307) target = $region44
        $region43: #{tpu_custom_call.1} parent=39 // pred_region
          %310 = dma.done %s303, 256
        $region44: #{tpu_custom_call.1} parent=39 // pred_fallthru
          _
        %s311 = sand.u32 %s26, 1
        %s312 = scalar_lea.sflag [#allocation10], %s311
        %s313 = sand.u32 %s83, 1
        %s314 = smul.addr %s313, 16
        %s315 = scalar_lea.vmem [#allocation9], %s314
        // Predicated region
        $region45: #{tpu_custom_call.1} parent=39 // pred_check
          %p316 = pneg %p96
        $region46: #{tpu_custom_call.1} parent=39 // pred_check_branch
          %318 = sbr.rel (%p316) target = $region48
        $region47: #{tpu_custom_call.1} parent=39 // pred_region
          %319 = dma.done %s312, 256
        $region48: #{tpu_custom_call.1} parent=39 // pred_fallthru
          _
        %s320 = sand.u32 %s26, 1
        %s321 = scalar_lea.sflag [#allocation10], %s320
        %s322 = sand.u32 %s111, 1
        %s323 = smul.addr %s322, 16
        %s324 = scalar_lea.vmem [#allocation11], %s323
        // Predicated region
        $region49: #{tpu_custom_call.1} parent=39 // pred_check
          %p325 = pneg %p124
        $region50: #{tpu_custom_call.1} parent=39 // pred_check_branch
          %327 = sbr.rel (%p325) target = $region52
        $region51: #{tpu_custom_call.1} parent=39 // pred_region
          %328 = dma.done %s321, 256
        $region52: #{tpu_custom_call.1} parent=39 // pred_fallthru
          _
        // Predicated region
        $region53: #{tpu_custom_call.1} parent=39 // pred_check
          %p329 = pneg %p145
        $region54: #{tpu_custom_call.1} parent=39 // pred_check_branch
          %331 = sbr.rel (%p329) target = $region56
        $region55: #{tpu_custom_call.1} parent=39 // pred_region
          %332 = dma.done [#allocation13], 256
        $region56: #{tpu_custom_call.1} parent=39 // pred_fallthru
          _
        %s333 = sand.u32 %s55, 1
        %s334 = scalar_lea.sflag [#allocation7], %s333
        %s335 = sand.u32 %s55, 1
        %s336 = smul.addr %s335, 16
        %s337 = scalar_lea.vmem [#allocation6], %s336
        %p338 = pneg %p68
        %p339 = pneg %p65
        %s340 = sand.u32 %s26, 1
        %s341 = scalar_lea.sflag [#allocation10], %s340
        %s342 = sand.u32 %s83, 1
        %s343 = smul.addr %s342, 16
        %s344 = scalar_lea.vmem [#allocation9], %s343
        %p345 = pneg %p96
        %p346 = pneg %p93
        %s347 = sand.u32 %s26, 1
        %s348 = scalar_lea.sflag [#allocation10], %s347
        %s349 = sand.u32 %s111, 1
        %s350 = smul.addr %s349, 16
        %s351 = scalar_lea.vmem [#allocation11], %s350
        %p352 = pneg %p124
        %p353 = pneg %p121
        %p354 = pneg %p145
        %p355 = pneg %p142
        %p356 = pneg %p166
        %p357 = pneg %p163
        %p358 = pneg %p194
        %p359 = pneg %p191
        %s360 = sand.u32 %s181, 1
        %s361 = scalar_lea.sflag [#allocation8], %s360
        %s362 = sand.u32 %s181, 1
        %s363 = smul.addr %s362, 4
        %s364 = scalar_lea.vmem [#allocation14], %s363
        %p366 = scmp.eq.s32.totalorder %s33, 0
        // Predicated region
        $region57: #{tpu_custom_call.1} parent=39 // pred_check
          %p367 = pneg %p366
        $region58: #{tpu_custom_call.1} parent=39 // pred_check_branch
          %369 = sbr.rel (%p367) target = $region60
        $region59: #{tpu_custom_call.1} parent=39 // pred_region
          %vm370 = vcmask 7168
          %371 = vst.msk [vmem:[#allocation2] sm:$0xff] %vm370, -inf
          %372 = vst.msk [vmem:[#allocation2 + $0x8] sm:$0xff] %vm370, -inf
          %373 = vst.msk [vmem:[#allocation2 + $0x10] sm:$0xff] %vm370, -inf
          %374 = vst.msk [vmem:[#allocation2 + $0x18] sm:$0xff] %vm370, -inf
          %375 = vst.msk [vmem:[#allocation3] sm:$0xff] %vm370, 0.0
          %376 = vst.msk [vmem:[#allocation3 + $0x8] sm:$0xff] %vm370, 0.0
          %377 = vst.msk [vmem:[#allocation3 + $0x10] sm:$0xff] %vm370, 0.0
          %378 = vst.msk [vmem:[#allocation3 + $0x18] sm:$0xff] %vm370, 0.0
          %vm379 = vcmask 64512
          %380 = vst.msk [vmem:[#allocation4] sm:$0xff] %vm379, 0.0
          %381 = vst.msk [vmem:[#allocation4 + $0x8] sm:$0xff] %vm379, 0.0
          %382 = vst.msk [vmem:[#allocation4 + $0x10] sm:$0xff] %vm379, 0.0
          %383 = vst.msk [vmem:[#allocation4 + $0x18] sm:$0xff] %vm379, 0.0
        $region60: #{tpu_custom_call.1} parent=39 // pred_fallthru
          _
        %v384 = vld [vmem:[%s306] sm:$0xf]
        %v385 = vld [vmem:[%s306 + $0x4] sm:$0xf]
        %v386 = vld [vmem:[%s306 + $0x8] sm:$0xf]
        %v387 = vld [vmem:[%s306 + $0xc] sm:$0xf]
        %v388 = vld [vmem:[%s315] sm:$0xf]
        %v389 = vld [vmem:[%s315 + $0x4] sm:$0xf]
        %v390 = vld [vmem:[%s315 + $0x8] sm:$0xf]
        %v391 = vld [vmem:[%s315 + $0xc] sm:$0xf]
        %v392 = vld [vmem:[%s324] sm:$0xf]
        %v393 = vld [vmem:[%s324 + $0x4] sm:$0xf]
        %v394 = vld [vmem:[%s324 + $0x8] sm:$0xf]
        %v395 = vld [vmem:[%s324 + $0xc] sm:$0xf]
        %vm396 = vcmask 64512
        %v398 = vsel %vm396, %v384, 0
        %v401 = vsel %vm396, %v388, 0
        %403 = vmatprep.subr.bf16.mxu0 0
        %404 = vmatpush1.bf16.xpose.msra.mxu0 %v401
        %405 = vmatprep.subr.bf16.mxu0 0
        %406 = vmatpush1.bf16.xpose.msra.mxu0 0
        %407 = vmatprep.subr.bf16.mxu0 0
        %408 = vmatpush1.bf16.xpose.msra.mxu0 0
        %409 = vmatprep.subr.bf16.mxu0 0
        %410 = vmatpush1.bf16.xpose.msra.mxu0 0
        %411 = vmatprep.subr.bf16.mxu0 0
        %412 = vmatpush1.bf16.xpose.msra.mxu0 0
        %413 = vmatprep.subr.bf16.mxu0 0
        %414 = vmatpush1.bf16.xpose.msra.mxu0 0
        %415 = vmatprep.subr.bf16.mxu0 0
        %416 = vmatpush1.bf16.xpose.msra.mxu0 0
        %417 = vmatprep.subr.bf16.mxu0 0
        %418 = vmatpush1.bf16.xpose.msra.mxu0 0
        %419 = vmatprep.subr.bf16.mxu0 0
        %420 = vmatpush1.bf16.xpose.msra.mxu0 0
        %421 = vmatprep.subr.bf16.mxu0 0
        %422 = vmatpush1.bf16.xpose.msra.mxu0 0
        %423 = vmatprep.subr.bf16.mxu0 0
        %424 = vmatpush1.bf16.xpose.msra.mxu0 0
        %425 = vmatprep.subr.bf16.mxu0 0
        %426 = vmatpush1.bf16.xpose.msra.mxu0 0
        %427 = vmatprep.subr.bf16.mxu0 0
        %428 = vmatpush1.bf16.xpose.msra.mxu0 0
        %429 = vmatprep.subr.bf16.mxu0 0
        %430 = vmatpush1.bf16.xpose.msra.mxu0 0
        %431 = vmatprep.subr.bf16.mxu0 0
        %432 = vmatpush1.bf16.xpose.msra.mxu0 0
        %433 = vmatprep.subr.bf16.mxu0 0
        %434 = vmatpush1.bf16.xpose.msra.mxu0 0
        %435 = vmatprep.mubr.bf16.mxu0 0
        %436 = vmatmul.mubr.bf16.gmra.mrb[0].mxu0 %v398
        %v437 = vpop.f32.mrb[0].mxu0
        %v438 = vadd.f32 0.0, %v437
        %v439 = vpop.f32.mrb[0].mxu0
        %v440 = vpop.f32.mrb[0].mxu0
        %v441 = vpop.f32.mrb[0].mxu0
        %442 = vdwg.mxu0
        %v444 = vsel %vm396, %v385, 0
        %v447 = vsel %vm396, %v389, 0
        %449 = vmatprep.subr.bf16.mxu0 0
        %450 = vmatpush1.bf16.xpose.msra.mxu0 %v447
        %451 = vmatprep.subr.bf16.mxu0 0
        %452 = vmatpush1.bf16.xpose.msra.mxu0 0
        %453 = vmatprep.subr.bf16.mxu0 0
        %454 = vmatpush1.bf16.xpose.msra.mxu0 0
        %455 = vmatprep.subr.bf16.mxu0 0
        %456 = vmatpush1.bf16.xpose.msra.mxu0 0
        %457 = vmatprep.subr.bf16.mxu0 0
        %458 = vmatpush1.bf16.xpose.msra.mxu0 0
        %459 = vmatprep.subr.bf16.mxu0 0
        %460 = vmatpush1.bf16.xpose.msra.mxu0 0
        %461 = vmatprep.subr.bf16.mxu0 0
        %462 = vmatpush1.bf16.xpose.msra.mxu0 0
        %463 = vmatprep.subr.bf16.mxu0 0
        %464 = vmatpush1.bf16.xpose.msra.mxu0 0
        %465 = vmatprep.subr.bf16.mxu0 0
        %466 = vmatpush1.bf16.xpose.msra.mxu0 0
        %467 = vmatprep.subr.bf16.mxu0 0
        %468 = vmatpush1.bf16.xpose.msra.mxu0 0
        %469 = vmatprep.subr.bf16.mxu0 0
        %470 = vmatpush1.bf16.xpose.msra.mxu0 0
        %471 = vmatprep.subr.bf16.mxu0 0
        %472 = vmatpush1.bf16.xpose.msra.mxu0 0
        %473 = vmatprep.subr.bf16.mxu0 0
        %474 = vmatpush1.bf16.xpose.msra.mxu0 0
        %475 = vmatprep.subr.bf16.mxu0 0
        %476 = vmatpush1.bf16.xpose.msra.mxu0 0
        %477 = vmatprep.subr.bf16.mxu0 0
        %478 = vmatpush1.bf16.xpose.msra.mxu0 0
        %479 = vmatprep.subr.bf16.mxu0 0
        %480 = vmatpush1.bf16.xpose.msra.mxu0 0
        %481 = vmatprep.mubr.bf16.mxu0 0
        %482 = vmatmul.mubr.bf16.gmra.mrb[0].mxu0 %v444
        %v483 = vpop.f32.mrb[0].mxu0
        %v484 = vadd.f32 0.0, %v483
        %v485 = vpop.f32.mrb[0].mxu0
        %v486 = vpop.f32.mrb[0].mxu0
        %v487 = vpop.f32.mrb[0].mxu0
        %488 = vdwg.mxu0
        %v490 = vsel %vm396, %v386, 0
        %v493 = vsel %vm396, %v390, 0
        %495 = vmatprep.subr.bf16.mxu0 0
        %496 = vmatpush1.bf16.xpose.msra.mxu0 %v493
        %497 = vmatprep.subr.bf16.mxu0 0
        %498 = vmatpush1.bf16.xpose.msra.mxu0 0
        %499 = vmatprep.subr.bf16.mxu0 0
        %500 = vmatpush1.bf16.xpose.msra.mxu0 0
        %501 = vmatprep.subr.bf16.mxu0 0
        %502 = vmatpush1.bf16.xpose.msra.mxu0 0
        %503 = vmatprep.subr.bf16.mxu0 0
        %504 = vmatpush1.bf16.xpose.msra.mxu0 0
        %505 = vmatprep.subr.bf16.mxu0 0
        %506 = vmatpush1.bf16.xpose.msra.mxu0 0
        %507 = vmatprep.subr.bf16.mxu0 0
        %508 = vmatpush1.bf16.xpose.msra.mxu0 0
        %509 = vmatprep.subr.bf16.mxu0 0
        %510 = vmatpush1.bf16.xpose.msra.mxu0 0
        %511 = vmatprep.subr.bf16.mxu0 0
        %512 = vmatpush1.bf16.xpose.msra.mxu0 0
        %513 = vmatprep.subr.bf16.mxu0 0
        %514 = vmatpush1.bf16.xpose.msra.mxu0 0
        %515 = vmatprep.subr.bf16.mxu0 0
        %516 = vmatpush1.bf16.xpose.msra.mxu0 0
        %517 = vmatprep.subr.bf16.mxu0 0
        %518 = vmatpush1.bf16.xpose.msra.mxu0 0
        %519 = vmatprep.subr.bf16.mxu0 0
        %520 = vmatpush1.bf16.xpose.msra.mxu0 0
        %521 = vmatprep.subr.bf16.mxu0 0
        %522 = vmatpush1.bf16.xpose.msra.mxu0 0
        %523 = vmatprep.subr.bf16.mxu0 0
        %524 = vmatpush1.bf16.xpose.msra.mxu0 0
        %525 = vmatprep.subr.bf16.mxu0 0
        %526 = vmatpush1.bf16.xpose.msra.mxu0 0
        %527 = vmatprep.mubr.bf16.mxu0 0
        %528 = vmatmul.mubr.bf16.gmra.mrb[0].mxu0 %v490
        %v529 = vpop.f32.mrb[0].mxu0
        %v530 = vadd.f32 0.0, %v529
        %v531 = vpop.f32.mrb[0].mxu0
        %v532 = vpop.f32.mrb[0].mxu0
        %v533 = vpop.f32.mrb[0].mxu0
        %534 = vdwg.mxu0
        %v536 = vsel %vm396, %v387, 0
        %v539 = vsel %vm396, %v391, 0
        %541 = vmatprep.subr.bf16.mxu0 0
        %542 = vmatpush1.bf16.xpose.msra.mxu0 %v539
        %543 = vmatprep.subr.bf16.mxu0 0
        %544 = vmatpush1.bf16.xpose.msra.mxu0 0
        %545 = vmatprep.subr.bf16.mxu0 0
        %546 = vmatpush1.bf16.xpose.msra.mxu0 0
        %547 = vmatprep.subr.bf16.mxu0 0
        %548 = vmatpush1.bf16.xpose.msra.mxu0 0
        %549 = vmatprep.subr.bf16.mxu0 0
        %550 = vmatpush1.bf16.xpose.msra.mxu0 0
        %551 = vmatprep.subr.bf16.mxu0 0
        %552 = vmatpush1.bf16.xpose.msra.mxu0 0
        %553 = vmatprep.subr.bf16.mxu0 0
        %554 = vmatpush1.bf16.xpose.msra.mxu0 0
        %555 = vmatprep.subr.bf16.mxu0 0
        %556 = vmatpush1.bf16.xpose.msra.mxu0 0
        %557 = vmatprep.subr.bf16.mxu0 0
        %558 = vmatpush1.bf16.xpose.msra.mxu0 0
        %559 = vmatprep.subr.bf16.mxu0 0
        %560 = vmatpush1.bf16.xpose.msra.mxu0 0
        %561 = vmatprep.subr.bf16.mxu0 0
        %562 = vmatpush1.bf16.xpose.msra.mxu0 0
        %563 = vmatprep.subr.bf16.mxu0 0
        %564 = vmatpush1.bf16.xpose.msra.mxu0 0
        %565 = vmatprep.subr.bf16.mxu0 0
        %566 = vmatpush1.bf16.xpose.msra.mxu0 0
        %567 = vmatprep.subr.bf16.mxu0 0
        %568 = vmatpush1.bf16.xpose.msra.mxu0 0
        %569 = vmatprep.subr.bf16.mxu0 0
        %570 = vmatpush1.bf16.xpose.msra.mxu0 0
        %571 = vmatprep.subr.bf16.mxu0 0
        %572 = vmatpush1.bf16.xpose.msra.mxu0 0
        %573 = vmatprep.mubr.bf16.mxu0 0
        %574 = vmatmul.mubr.bf16.gmra.mrb[0].mxu0 %v536
        %v575 = vpop.f32.mrb[0].mxu0
        %v576 = vadd.f32 0.0, %v575
        %v577 = vpop.f32.mrb[0].mxu0
        %v578 = vpop.f32.mrb[0].mxu0
        %v579 = vpop.f32.mrb[0].mxu0
        %580 = vdwg.mxu0
        %v581 = vld [vmem:[#allocation2] sm:$0xff]
        %v582 = vld [vmem:[#allocation2 + $0x8] sm:$0xff]
        %v583 = vld [vmem:[#allocation2 + $0x10] sm:$0xff]
        %v584 = vld [vmem:[#allocation2 + $0x18] sm:$0xff]
        %v585 = vsel %vm396, %v438, -inf
        %586 = vmax.xlane.f32.xlu0 %v585
        %v587 = vpop.xlane.xlu0 %586
        %v588 = vsel %vm396, %v484, -inf
        %589 = vmax.xlane.f32.xlu0 %v588
        %v590 = vpop.xlane.xlu0 %589
        %v591 = vsel %vm396, %v530, -inf
        %592 = vmax.xlane.f32.xlu0 %v591
        %v593 = vpop.xlane.xlu0 %592
        %v594 = vsel %vm396, %v576, -inf
        %595 = vmax.xlane.f32.xlu0 %v594
        %v596 = vpop.xlane.xlu0 %595
        %v597 = vmax.f32 %v581, %v587
        %v598 = vmax.f32 %v582, %v590
        %v599 = vmax.f32 %v583, %v593
        %v600 = vmax.f32 %v584, %v596
        %v601 = vsub.f32 %v581, %v597
        %v602 = vsub.f32 %v582, %v598
        %v603 = vsub.f32 %v583, %v599
        %v604 = vsub.f32 %v584, %v600
        %v605 = vmul.f32 %v601, 1.442695
        %v606 = vpow.pop %v605
        %v607 = vmul.f32 %v602, 1.442695
        %v608 = vpow.pop %v607
        %v609 = vmul.f32 %v603, 1.442695
        %v610 = vpow.pop %v609
        %v611 = vmul.f32 %v604, 1.442695
        %v612 = vpow.pop %v611
        %614 = vset.pattern.permute.xlu0 0
        %615 = vperm.xlu0 %614, %v597
        %v616 = vpop.permute.xlu0 %615
        %619 = vset.pattern.permute.xlu0 0
        %620 = vperm.xlu0 %619, %v598
        %v621 = vpop.permute.xlu0 %620
        %624 = vset.pattern.permute.xlu0 0
        %625 = vperm.xlu0 %624, %v599
        %v626 = vpop.permute.xlu0 %625
        %629 = vset.pattern.permute.xlu0 0
        %630 = vperm.xlu0 %629, %v600
        %v631 = vpop.permute.xlu0 %630
        %v633 = vsub.f32 %v438, %v616
        %v634 = vsub.f32 %v484, %v621
        %v635 = vsub.f32 %v530, %v626
        %v636 = vsub.f32 %v576, %v631
        %v637 = vmul.f32 %v633, 1.442695
        %v638 = vpow.pop %v637
        %v639 = vmul.f32 %v634, 1.442695
        %v640 = vpow.pop %v639
        %v641 = vmul.f32 %v635, 1.442695
        %v642 = vpow.pop %v641
        %v643 = vmul.f32 %v636, 1.442695
        %v644 = vpow.pop %v643
        %v645 = vld [vmem:[#allocation3] sm:$0xff]
        %v646 = vld [vmem:[#allocation3 + $0x8] sm:$0xff]
        %v647 = vld [vmem:[#allocation3 + $0x10] sm:$0xff]
        %v648 = vld [vmem:[#allocation3 + $0x18] sm:$0xff]
        %v649 = vmul.f32 %v606, %v645
        %v650 = vmul.f32 %v608, %v646
        %v651 = vmul.f32 %v610, %v647
        %v652 = vmul.f32 %v612, %v648
        %v653 = vsel %vm396, %v638, 0.0
        %654 = vadd.xlane.f32.xlu0 %v653
        %v655 = vpop.xlane.xlu0 %654
        %v656 = vsel %vm396, %v640, 0.0
        %657 = vadd.xlane.f32.xlu0 %v656
        %v658 = vpop.xlane.xlu0 %657
        %v659 = vsel %vm396, %v642, 0.0
        %660 = vadd.xlane.f32.xlu0 %v659
        %v661 = vpop.xlane.xlu0 %660
        %v662 = vsel %vm396, %v644, 0.0
        %663 = vadd.xlane.f32.xlu0 %v662
        %v664 = vpop.xlane.xlu0 %663
        %v665 = vadd.f32 %v649, %v655
        %v666 = vadd.f32 %v650, %v658
        %v667 = vadd.f32 %v651, %v661
        %v668 = vadd.f32 %v652, %v664
        %vm669 = vcmask 7168
        %670 = vst.msk [vmem:[#allocation3] sm:$0xff] %vm669, %v665
        %671 = vst.msk [vmem:[#allocation3 + $0x8] sm:$0xff] %vm669, %v666
        %672 = vst.msk [vmem:[#allocation3 + $0x10] sm:$0xff] %vm669, %v667
        %673 = vst.msk [vmem:[#allocation3 + $0x18] sm:$0xff] %vm669, %v668
        %v674 = vpack.c.bf16 %v638, %v638
        %v675 = vpack.c.bf16 %v640, %v640
        %v676 = vpack.c.bf16 %v642, %v642
        %v677 = vpack.c.bf16 %v644, %v644
        %v679 = vsel %vm396, %v674, 0
        %vm681 = vcmask 1043456
        %v683 = vsel %vm681, %v392, 0
        %685 = vmatprep.subr.bf16.mxu0 0
        %686 = vmatpush1.bf16.msra.mxu0 %v683
        %687 = vmatprep.subr.bf16.mxu0 0
        %688 = vmatpush1.bf16.msra.mxu0 0
        %689 = vmatprep.subr.bf16.mxu0 0
        %690 = vmatpush1.bf16.msra.mxu0 0
        %691 = vmatprep.subr.bf16.mxu0 0
        %692 = vmatpush1.bf16.msra.mxu0 0
        %693 = vmatprep.subr.bf16.mxu0 0
        %694 = vmatpush1.bf16.msra.mxu0 0
        %695 = vmatprep.subr.bf16.mxu0 0
        %696 = vmatpush1.bf16.msra.mxu0 0
        %697 = vmatprep.subr.bf16.mxu0 0
        %698 = vmatpush1.bf16.msra.mxu0 0
        %699 = vmatprep.subr.bf16.mxu0 0
        %700 = vmatpush1.bf16.msra.mxu0 0
        %701 = vmatprep.subr.bf16.mxu0 0
        %702 = vmatpush1.bf16.msra.mxu0 0
        %703 = vmatprep.subr.bf16.mxu0 0
        %704 = vmatpush1.bf16.msra.mxu0 0
        %705 = vmatprep.subr.bf16.mxu0 0
        %706 = vmatpush1.bf16.msra.mxu0 0
        %707 = vmatprep.subr.bf16.mxu0 0
        %708 = vmatpush1.bf16.msra.mxu0 0
        %709 = vmatprep.subr.bf16.mxu0 0
        %710 = vmatpush1.bf16.msra.mxu0 0
        %711 = vmatprep.subr.bf16.mxu0 0
        %712 = vmatpush1.bf16.msra.mxu0 0
        %713 = vmatprep.subr.bf16.mxu0 0
        %714 = vmatpush1.bf16.msra.mxu0 0
        %715 = vmatprep.subr.bf16.mxu0 0
        %716 = vmatpush1.bf16.msra.mxu0 0
        %717 = vmatprep.mubr.bf16.mxu0 0
        %718 = vmatmul.mubr.bf16.gmra.mrb[0].mxu0 %v679
        %v719 = vpop.f32.mrb[0].mxu0
        %v720 = vadd.f32 0.0, %v719
        %v721 = vpop.f32.mrb[0].mxu0
        %v722 = vpop.f32.mrb[0].mxu0
        %v723 = vpop.f32.mrb[0].mxu0
        %724 = vdwg.mxu0
        %v726 = vsel %vm396, %v675, 0
        %v729 = vsel %vm681, %v393, 0
        %731 = vmatprep.subr.bf16.mxu0 0
        %732 = vmatpush1.bf16.msra.mxu0 %v729
        %733 = vmatprep.subr.bf16.mxu0 0
        %734 = vmatpush1.bf16.msra.mxu0 0
        %735 = vmatprep.subr.bf16.mxu0 0
        %736 = vmatpush1.bf16.msra.mxu0 0
        %737 = vmatprep.subr.bf16.mxu0 0
        %738 = vmatpush1.bf16.msra.mxu0 0
        %739 = vmatprep.subr.bf16.mxu0 0
        %740 = vmatpush1.bf16.msra.mxu0 0
        %741 = vmatprep.subr.bf16.mxu0 0
        %742 = vmatpush1.bf16.msra.mxu0 0
        %743 = vmatprep.subr.bf16.mxu0 0
        %744 = vmatpush1.bf16.msra.mxu0 0
        %745 = vmatprep.subr.bf16.mxu0 0
        %746 = vmatpush1.bf16.msra.mxu0 0
        %747 = vmatprep.subr.bf16.mxu0 0
        %748 = vmatpush1.bf16.msra.mxu0 0
        %749 = vmatprep.subr.bf16.mxu0 0
        %750 = vmatpush1.bf16.msra.mxu0 0
        %751 = vmatprep.subr.bf16.mxu0 0
        %752 = vmatpush1.bf16.msra.mxu0 0
        %753 = vmatprep.subr.bf16.mxu0 0
        %754 = vmatpush1.bf16.msra.mxu0 0
        %755 = vmatprep.subr.bf16.mxu0 0
        %756 = vmatpush1.bf16.msra.mxu0 0
        %757 = vmatprep.subr.bf16.mxu0 0
        %758 = vmatpush1.bf16.msra.mxu0 0
        %759 = vmatprep.subr.bf16.mxu0 0
        %760 = vmatpush1.bf16.msra.mxu0 0
        %761 = vmatprep.subr.bf16.mxu0 0
        %762 = vmatpush1.bf16.msra.mxu0 0
        %763 = vmatprep.mubr.bf16.mxu0 0
        %764 = vmatmul.mubr.bf16.gmra.mrb[0].mxu0 %v726
        %v765 = vpop.f32.mrb[0].mxu0
        %v766 = vadd.f32 0.0, %v765
        %v767 = vpop.f32.mrb[0].mxu0
        %v768 = vpop.f32.mrb[0].mxu0
        %v769 = vpop.f32.mrb[0].mxu0
        %770 = vdwg.mxu0
        %v772 = vsel %vm396, %v676, 0
        %v775 = vsel %vm681, %v394, 0
        %777 = vmatprep.subr.bf16.mxu0 0
        %778 = vmatpush1.bf16.msra.mxu0 %v775
        %779 = vmatprep.subr.bf16.mxu0 0
        %780 = vmatpush1.bf16.msra.mxu0 0
        %781 = vmatprep.subr.bf16.mxu0 0
        %782 = vmatpush1.bf16.msra.mxu0 0
        %783 = vmatprep.subr.bf16.mxu0 0
        %784 = vmatpush1.bf16.msra.mxu0 0
        %785 = vmatprep.subr.bf16.mxu0 0
        %786 = vmatpush1.bf16.msra.mxu0 0
        %787 = vmatprep.subr.bf16.mxu0 0
        %788 = vmatpush1.bf16.msra.mxu0 0
        %789 = vmatprep.subr.bf16.mxu0 0
        %790 = vmatpush1.bf16.msra.mxu0 0
        %791 = vmatprep.subr.bf16.mxu0 0
        %792 = vmatpush1.bf16.msra.mxu0 0
        %793 = vmatprep.subr.bf16.mxu0 0
        %794 = vmatpush1.bf16.msra.mxu0 0
        %795 = vmatprep.subr.bf16.mxu0 0
        %796 = vmatpush1.bf16.msra.mxu0 0
        %797 = vmatprep.subr.bf16.mxu0 0
        %798 = vmatpush1.bf16.msra.mxu0 0
        %799 = vmatprep.subr.bf16.mxu0 0
        %800 = vmatpush1.bf16.msra.mxu0 0
        %801 = vmatprep.subr.bf16.mxu0 0
        %802 = vmatpush1.bf16.msra.mxu0 0
        %803 = vmatprep.subr.bf16.mxu0 0
        %804 = vmatpush1.bf16.msra.mxu0 0
        %805 = vmatprep.subr.bf16.mxu0 0
        %806 = vmatpush1.bf16.msra.mxu0 0
        %807 = vmatprep.subr.bf16.mxu0 0
        %808 = vmatpush1.bf16.msra.mxu0 0
        %809 = vmatprep.mubr.bf16.mxu0 0
        %810 = vmatmul.mubr.bf16.gmra.mrb[0].mxu0 %v772
        %v811 = vpop.f32.mrb[0].mxu0
        %v812 = vadd.f32 0.0, %v811
        %v813 = vpop.f32.mrb[0].mxu0
        %v814 = vpop.f32.mrb[0].mxu0
        %v815 = vpop.f32.mrb[0].mxu0
        %816 = vdwg.mxu0
        %v818 = vsel %vm396, %v677, 0
        %v821 = vsel %vm681, %v395, 0
        %823 = vmatprep.subr.bf16.mxu0 0
        %824 = vmatpush1.bf16.msra.mxu0 %v821
        %825 = vmatprep.subr.bf16.mxu0 0
        %826 = vmatpush1.bf16.msra.mxu0 0
        %827 = vmatprep.subr.bf16.mxu0 0
        %828 = vmatpush1.bf16.msra.mxu0 0
        %829 = vmatprep.subr.bf16.mxu0 0
        %830 = vmatpush1.bf16.msra.mxu0 0
        %831 = vmatprep.subr.bf16.mxu0 0
        %832 = vmatpush1.bf16.msra.mxu0 0
        %833 = vmatprep.subr.bf16.mxu0 0
        %834 = vmatpush1.bf16.msra.mxu0 0
        %835 = vmatprep.subr.bf16.mxu0 0
        %836 = vmatpush1.bf16.msra.mxu0 0
        %837 = vmatprep.subr.bf16.mxu0 0
        %838 = vmatpush1.bf16.msra.mxu0 0
        %839 = vmatprep.subr.bf16.mxu0 0
        %840 = vmatpush1.bf16.msra.mxu0 0
        %841 = vmatprep.subr.bf16.mxu0 0
        %842 = vmatpush1.bf16.msra.mxu0 0
        %843 = vmatprep.subr.bf16.mxu0 0
        %844 = vmatpush1.bf16.msra.mxu0 0
        %845 = vmatprep.subr.bf16.mxu0 0
        %846 = vmatpush1.bf16.msra.mxu0 0
        %847 = vmatprep.subr.bf16.mxu0 0
        %848 = vmatpush1.bf16.msra.mxu0 0
        %849 = vmatprep.subr.bf16.mxu0 0
        %850 = vmatpush1.bf16.msra.mxu0 0
        %851 = vmatprep.subr.bf16.mxu0 0
        %852 = vmatpush1.bf16.msra.mxu0 0
        %853 = vmatprep.subr.bf16.mxu0 0
        %854 = vmatpush1.bf16.msra.mxu0 0
        %855 = vmatprep.mubr.bf16.mxu0 0
        %856 = vmatmul.mubr.bf16.gmra.mrb[0].mxu0 %v818
        %v857 = vpop.f32.mrb[0].mxu0
        %v858 = vadd.f32 0.0, %v857
        %v859 = vpop.f32.mrb[0].mxu0
        %v860 = vpop.f32.mrb[0].mxu0
        %v861 = vpop.f32.mrb[0].mxu0
        %862 = vdwg.mxu0
        %v863 = vld [vmem:[#allocation4] sm:$0xff]
        %v864 = vld [vmem:[#allocation4 + $0x8] sm:$0xff]
        %v865 = vld [vmem:[#allocation4 + $0x10] sm:$0xff]
        %v866 = vld [vmem:[#allocation4 + $0x18] sm:$0xff]
        %868 = vset.pattern.permute.xlu0 0
        %869 = vperm.xlu0 %868, %v606
        %v870 = vpop.permute.xlu0 %869
        %873 = vset.pattern.permute.xlu0 0
        %874 = vperm.xlu0 %873, %v608
        %v875 = vpop.permute.xlu0 %874
        %878 = vset.pattern.permute.xlu0 0
        %879 = vperm.xlu0 %878, %v610
        %v880 = vpop.permute.xlu0 %879
        %883 = vset.pattern.permute.xlu0 0
        %884 = vperm.xlu0 %883, %v612
        %v885 = vpop.permute.xlu0 %884
        %v887 = vmul.f32 %v870, %v863
        %v888 = vmul.f32 %v875, %v864
        %v889 = vmul.f32 %v880, %v865
        %v890 = vmul.f32 %v885, %v866
        %v891 = vadd.f32 %v887, %v720
        %v892 = vadd.f32 %v888, %v766
        %v893 = vadd.f32 %v889, %v812
        %v894 = vadd.f32 %v890, %v858
        %895 = vst.msk [vmem:[#allocation4] sm:$0xff] %vm396, %v891
        %896 = vst.msk [vmem:[#allocation4 + $0x8] sm:$0xff] %vm396, %v892
        %897 = vst.msk [vmem:[#allocation4 + $0x10] sm:$0xff] %vm396, %v893
        %898 = vst.msk [vmem:[#allocation4 + $0x18] sm:$0xff] %vm396, %v894
        %899 = vst.msk [vmem:[#allocation2] sm:$0xff] %vm669, %v597
        %900 = vst.msk [vmem:[#allocation2 + $0x8] sm:$0xff] %vm669, %v598
        %901 = vst.msk [vmem:[#allocation2 + $0x10] sm:$0xff] %vm669, %v599
        %902 = vst.msk [vmem:[#allocation2 + $0x18] sm:$0xff] %vm669, %v600
        // Predicated region
        $region61: #{tpu_custom_call.1} parent=39 // pred_check
          %p903 = pneg %p366
        $region62: #{tpu_custom_call.1} parent=39 // pred_check_branch
          %905 = sbr.rel (%p903) target = $region64
        $region63: #{tpu_custom_call.1} parent=39 // pred_region
          %v906 = vld [vmem:[#allocation3] sm:$0xff]
          %v907 = vrcp.pop %v906
          %v908 = vld [vmem:[#allocation4] sm:$0xff]
          %910 = vset.pattern.permute.xlu0 0
          %911 = vperm.xlu0 %910, %v907
          %v912 = vpop.permute.xlu0 %911
          %v914 = vmul.f32 %v908, %v912
          %v915 = vpack.c.bf16 %v914, %v914
          %vm916 = vcmask 60416
          %917 = vst.msk [vmem:[#allocation5] sm:$0xf] %vm916, %v915
          %s918 = scalar_lea.vmem [#allocation3], 8
          %v919 = vld [vmem:[%s918] sm:$0xff]
          %v920 = vrcp.pop %v919
          %s921 = scalar_lea.vmem [#allocation4], 8
          %v922 = vld [vmem:[%s921] sm:$0xff]
          %924 = vset.pattern.permute.xlu0 0
          %925 = vperm.xlu0 %924, %v920
          %v926 = vpop.permute.xlu0 %925
          %v928 = vmul.f32 %v922, %v926
          %v929 = vpack.c.bf16 %v928, %v928
          %v931 = vunpack.c.l.b16 %v929
          %v932 = vpack.c.b16 %v931, %v931
          %933 = vrot.lane.b32.xlu0 %v932, 8
          %v934 = vpop.permute.xlu0 %933
          %vm936 = vcmask 126016
          %937 = vst.msk [vmem:[#allocation5] sm:$0xf] %vm936, %v934
          %s938 = scalar_lea.vmem [#allocation3], 16
          %v939 = vld [vmem:[%s938] sm:$0xff]
          %v940 = vrcp.pop %v939
          %s941 = scalar_lea.vmem [#allocation4], 16
          %v942 = vld [vmem:[%s941] sm:$0xff]
          %944 = vset.pattern.permute.xlu0 0
          %945 = vperm.xlu0 %944, %v940
          %v946 = vpop.permute.xlu0 %945
          %v948 = vmul.f32 %v942, %v946
          %v949 = vpack.c.bf16 %v948, %v948
          %v951 = vunpack.c.l.b16 %v949
          %v952 = vpack.c.b16 %v951, %v951
          %953 = vrot.lane.b32.xlu0 %v952, 16
          %v954 = vpop.permute.xlu0 %953
          %vm956 = vcmask 191616
          %957 = vst.msk [vmem:[#allocation5] sm:$0xf] %vm956, %v954
          %s958 = scalar_lea.vmem [#allocation3], 24
          %v959 = vld [vmem:[%s958] sm:$0xff]
          %v960 = vrcp.pop %v959
          %s961 = scalar_lea.vmem [#allocation4], 24
          %v962 = vld [vmem:[%s961] sm:$0xff]
          %964 = vset.pattern.permute.xlu0 0
          %965 = vperm.xlu0 %964, %v960
          %v966 = vpop.permute.xlu0 %965
          %v968 = vmul.f32 %v962, %v966
          %v969 = vpack.c.bf16 %v968, %v968
          %v971 = vunpack.c.l.b16 %v969
          %v972 = vpack.c.b16 %v971, %v971
          %973 = vrot.lane.b32.xlu0 %v972, 24
          %v974 = vpop.permute.xlu0 %973
          %vm976 = vcmask 257216
          %977 = vst.msk [vmem:[#allocation5] sm:$0xf] %vm976, %v974
          %v978 = vld [vmem:[#allocation5] sm:$0xf]
          %v979 = vld [vmem:[#allocation12] sm:$0xf]
          %v980 = vld [vmem:[#allocation12 + $0x4] sm:$0xf]
          %v981 = vld [vmem:[#allocation12 + $0x8] sm:$0xf]
          %v982 = vld [vmem:[#allocation12 + $0xc] sm:$0xf]
          %v983 = vld [vmem:[%s4] sm:$0x1]
          %v985 = vlaneseq
          %v986 = vshrl.u32 %v985, 7
          %v987 = vsub.s32 0, %v986
          %v988 = vrot.slane %v983, %v987
          %v994 = vunpack.c.l.b16 %v979
          %v995 = vunpack.c.l.b16 %v980
          %v996 = vunpack.c.l.b16 %v981
          %v997 = vunpack.c.l.b16 %v982
          %v998 = vpack.c.b16 %v995, %v994
          %v999 = vpack.c.b16 %v997, %v996
          %vm1002 = vcmask 261120
          %v1004 = vsel %vm1002, %v978, 0
          %1006 = vmatprep.subr.bf16.mxu0 0
          %1007 = vmatpush1.bf16.msra.mxu0 %v998
          %1008 = vmatprep.subr.bf16.mxu0 0
          %1009 = vmatpush1.bf16.msra.mxu0 %v999
          %1010 = vmatprep.subr.bf16.mxu0 0
          %1011 = vmatpush1.bf16.msra.mxu0 0
          %1012 = vmatprep.subr.bf16.mxu0 0
          %1013 = vmatpush1.bf16.msra.mxu0 0
          %1014 = vmatprep.subr.bf16.mxu0 0
          %1015 = vmatpush1.bf16.msra.mxu0 0
          %1016 = vmatprep.subr.bf16.mxu0 0
          %1017 = vmatpush1.bf16.msra.mxu0 0
          %1018 = vmatprep.subr.bf16.mxu0 0
          %1019 = vmatpush1.bf16.msra.mxu0 0
          %1020 = vmatprep.subr.bf16.mxu0 0
          %1021 = vmatpush1.bf16.msra.mxu0 0
          %1022 = vmatprep.subr.bf16.mxu0 0
          %1023 = vmatpush1.bf16.msra.mxu0 0
          %1024 = vmatprep.subr.bf16.mxu0 0
          %1025 = vmatpush1.bf16.msra.mxu0 0
          %1026 = vmatprep.subr.bf16.mxu0 0
          %1027 = vmatpush1.bf16.msra.mxu0 0
          %1028 = vmatprep.subr.bf16.mxu0 0
          %1029 = vmatpush1.bf16.msra.mxu0 0
          %1030 = vmatprep.subr.bf16.mxu0 0
          %1031 = vmatpush1.bf16.msra.mxu0 0
          %1032 = vmatprep.subr.bf16.mxu0 0
          %1033 = vmatpush1.bf16.msra.mxu0 0
          %1034 = vmatprep.subr.bf16.mxu0 0
          %1035 = vmatpush1.bf16.msra.mxu0 0
          %1036 = vmatprep.subr.bf16.mxu0 0
          %1037 = vmatpush1.bf16.msra.mxu0 0
          %1038 = vmatprep.mubr.bf16.mxu0 0
          %1039 = vmatmul.mubr.bf16.gmra.mrb[0].mxu0 %v1004
          %v1040 = vpop.f32.mrb[0].mxu0
          %v1041 = vadd.f32 %v988, %v1040
          %v1042 = vpop.f32.mrb[0].mxu0
          %v1043 = vpop.f32.mrb[0].mxu0
          %v1044 = vpop.f32.mrb[0].mxu0
          %1045 = vdwg.mxu0
          %v1046 = vpack.c.bf16 %v1041, %v1041
          %vm1047 = vcmask 257024
          %1048 = vst.msk [vmem:[%s364] sm:$0xf] %vm1047, %v1046
        $region64: #{tpu_custom_call.1} parent=39 // pred_fallthru
          _
        %s1049 = sand.u32 %s181, 1
        %s1050 = scalar_lea.sflag [#allocation8], %s1049
        %s1051 = sand.u32 %s181, 1
        %s1052 = smul.addr %s1051, 4
        %s1053 = scalar_lea.vmem [#allocation14], %s1052
        // Predicated region
        $region65: #{tpu_custom_call.1} parent=39 // pred_check
          %p1054 = pneg %p191
        $region66: #{tpu_custom_call.1} parent=39 // pred_check_branch
          %1056 = sbr.rel (%p1054) target = $region68
        $region67: #{tpu_custom_call.1} parent=39 // pred_region
          %s1058 = ssub.s32 64, 64
          %1059 = vsyncadd %s1050, %s1058
          %s1060 = sadd.s32 %s32, %s31
          %s1061 = smul.addr %s1060, 64
          %s1062 = scalar_lea.hbm %s5, %s1061
          %s1064 = sshll.u32 %s1053, 4
          %s1065 = int_to_ptr.vmem [resolvable:$true] %s1064
          %1067 = dma.vmem_to_hbm [thread:$0]  %s1065, 64, %s1062, %s1050
        $region68: #{tpu_custom_call.1} parent=39 // pred_fallthru
          _
      $region40: #{tpu_custom_call.1} parent=5 // pred_fallthru
        _
      %p1068 = scmp.le.s32.totalorder 2, %s21
      // Predicated region
      $region69: #{tpu_custom_call.1} parent=5 // pred_check
        %p1069 = pneg %p1068
      $region70: #{tpu_custom_call.1} parent=5 // pred_check_branch
        %1071 = sbr.rel (%p1069) target = $region72
      $region71: #{tpu_custom_call.1} parent=5 // pred_region
        %s1072 = ssub.s32 %s21, 2
        // Predicated region
        $region73: #{tpu_custom_call.1} parent=71 // pred_check
          %p1073 = pneg %p197
        $region74: #{tpu_custom_call.1} parent=71 // pred_check_branch
          %1075 = sbr.rel (%p1073) target = $region76
        $region75: #{tpu_custom_call.1} parent=71 // pred_region
          %s1076 = sand.u32 %s182, 1
          %s1077 = scalar_lea.sflag [#allocation8], %s1076
          %s1078 = sand.u32 %s182, 1
          %s1079 = smul.addr %s1078, 4
          %s1080 = scalar_lea.vmem [#allocation14], %s1079
          %1081 = dma.done %s1077, 64
        $region76: #{tpu_custom_call.1} parent=71 // pred_fallthru
          _
      $region72: #{tpu_custom_call.1} parent=5 // pred_fallthru
        _
    $region6: #{tpu_custom_call.1} parent=1 // loop_footer
      %s25 = sadd.s32 1, %s21
    $region7: #{tpu_custom_call.1} parent=1 // loop_footer_branch
      %20 = sbr.rel target = $region3
    $region8: #{tpu_custom_call.1} parent=1 // loop_exit
      _
    %1082 = vsyncpa [#allocation7], 1
    %s1083 = scalar_lea.sflag [#allocation7], 1
    %1084 = vsyncpa %s1083, 1
    %1085 = vsyncpa [#allocation10], 1
    %s1086 = scalar_lea.sflag [#allocation10], 1
    %1087 = vsyncpa %s1086, 1
    %1088 = vsyncpa [#allocation13], 1
    %1089 = vsyncpa [#allocation8], 1
    %s1090 = scalar_lea.sflag [#allocation8], 1
    %1091 = vsyncpa %s1090, 1

</llo_original>
